<compile_context>
chip_gen: v6e
topology: v6e:2x2x1
jax: 0.10.0
libtpu: 0.0.40
codegen_flags: <defaults>
</compile_context>

<pallas_src>
import numpy as np
import jax
import jax.numpy as jnp
from jax.experimental import pallas as pl
from jax.experimental.pallas import tpu as pltpu

# ---- constants from the PyTorch module ----
B_J0 = 0.01
BETA = 1.8            # isAdapt=1
TAU_M = 20.0
DT = 1.0
R_M = 1.0

ALPHA = float(np.exp(-DT / TAU_M))
ONE_MINUS_ALPHA_RM = float((1.0 - np.exp(-DT / TAU_M)) * R_M)

LANE = 128
SUBLANE = 8


def _round_up(v, m):
    return ((v + m - 1) // m) * m


# ---------------------------------------------------------------------------
# Pallas kernel: one time step per grid iteration, state in VMEM scratch
# ---------------------------------------------------------------------------
def lsnn_step_kernel(xin1_ref, wh1_ref, w2_ref, b2_ref, w3_ref, b3_ref,
                     ro1_ref, ro2_ref, ro3_ref,
                     mem3_seq_ref, sp3_seq_ref,
                     fmem1_ref, fmem2_ref, fmem3_ref,
                     fsp1_ref, fsp2_ref, fsp3_ref,
                     fb1_ref, fb2_ref, fb3_ref,
                     mem1_s, sp1_s, b1_s,
                     mem2_s, sp2_s, b2_s,
                     mem3_s, sp3_s, b3_s):
    f32 = jnp.float32
    t = pl.program_id(1)

    # init_state (zeros for mem/spike, scalar b_j0 for b) at the start of each
    # batch block's time sweep.
    @pl.when(t == 0)
    def _init():
        for m_s, s_s, bb_s in ((mem1_s, sp1_s, b1_s),
                               (mem2_s, sp2_s, b2_s),
                               (mem3_s, sp3_s, b3_s)):
            m_s[...] = jnp.zeros_like(m_s)
            s_s[...] = jnp.zeros_like(s_s)
            bb_s[...] = jnp.full_like(bb_s, B_J0)

    def alif_update(inputs, mem_ref, sp_ref, b_ref, ro):
        # mem_update_adp (isAdapt=1): uses the OLD spike for both the
        # adaptation update and the reset term, then thresholds (dt = 1).
        spike_old = sp_ref[...]
        b_new = ro * b_ref[...] + (1.0 - ro) * spike_old
        Bth = B_J0 + BETA * b_new
        mem_new = (mem_ref[...] * ALPHA
                   + ONE_MINUS_ALPHA_RM * inputs
                   - Bth * spike_old)
        spike_new = (mem_new - Bth > 0.0).astype(f32)      # ActFun_adp forward
        mem_ref[...] = mem_new
        sp_ref[...] = spike_new
        b_ref[...] = b_new
        return mem_new, spike_new

    # ---- layer 1: x @ Wi1 + bi1 + bh1 precomputed outside (xin1) ----
    h1_in = xin1_ref[0] + jnp.dot(sp1_s[...], wh1_ref[...],
                                  preferred_element_type=f32)
    _, sp1_new = alif_update(h1_in, mem1_s, sp1_s, b1_s, ro1_ref[...])

    # ---- layer 2: fused [Wi2; Wh2] single MXU launch ----
    in2 = jnp.concatenate([sp1_new, sp2_s[...]], axis=-1)
    h2_in = jnp.dot(in2, w2_ref[...], preferred_element_type=f32) + b2_ref[...]
    _, sp2_new = alif_update(h2_in, mem2_s, sp2_s, b2_s, ro2_ref[...])

    # ---- layer 3: fused [Wi3; Wh3] single MXU launch ----
    in3 = jnp.concatenate([sp2_new, sp3_s[...]], axis=-1)
    h3_in = jnp.dot(in3, w3_ref[...], preferred_element_type=f32) + b3_ref[...]
    mem3_new, sp3_new = alif_update(h3_in, mem3_s, sp3_s, b3_s, ro3_ref[...])

    # per-step outputs (lane-dense, 128-wide); readout matmul deferred to wrapper
    mem3_seq_ref[0] = mem3_new
    sp3_seq_ref[0] = sp3_new

    # final state writeback on the last time step
    @pl.when(t == pl.num_programs(1) - 1)
    def _final():
        fmem1_ref[...] = mem1_s[...]
        fmem2_ref[...] = mem2_s[...]
        fmem3_ref[...] = mem3_s[...]
        fsp1_ref[...] = sp1_s[...]
        fsp2_ref[...] = sp2_s[...]
        fsp3_ref[...] = sp3_s[...]
        fb1_ref[...] = b1_s[...]
        fb2_ref[...] = b2_s[...]
        fb3_ref[...] = b3_s[...]


# ---------------------------------------------------------------------------
# Wrapper: padding, weight fusion, hoisted input/readout matmuls, pallas_call
# ---------------------------------------------------------------------------
def lsnn_alif_forward(x_ntf, params, n_block=SUBLANE):
    """x_ntf: (N, T, IN) float32.  Returns (output, final_state, fire_rate, hidden_spike)."""
    f32 = jnp.float32
    N, T, IN = x_ntf.shape
    H1 = params["wi1"].shape[1]
    H2 = params["wi2"].shape[1]
    H3 = params["wi3"].shape[1]
    OUT = params["wo"].shape[1]

    Np = _round_up(N, n_block)
    H1p = _round_up(H1, LANE)
    H2p = _round_up(H2, LANE)
    H3p = _round_up(H3, LANE)
    NB = Np // n_block

    # ---- hoisted layer-1 input projection: one (T*N, IN) x (IN, H1) matmul ----
    x_tnf = jnp.transpose(x_ntf, (1, 0, 2)).astype(f32)            # (T, N, IN)
    xin1 = (x_tnf.reshape(T * N, IN) @ params["wi1"]
            + params["bi1"] + params["bh1"]).reshape(T, N, H1)
    xin1 = jnp.pad(xin1, ((0, 0), (0, Np - N), (0, H1p - H1)))     # (T, Np, H1p)

    # ---- padded / fused recurrent weights ----
    wh1 = jnp.pad(params["wh1"], ((0, H1p - H1), (0, H1p - H1)))

    w2 = jnp.zeros((H1p + H2p, H2p), f32)
    w2 = w2.at[:H1, :H2].set(params["wi2"])
    w2 = w2.at[H1p:H1p + H2, :H2].set(params["wh2"])
    b2 = jnp.pad(params["bi2"] + params["bh2"], ((0, 0), (0, H2p - H2)))

    w3 = jnp.zeros((H2p + H3p, H3p), f32)
    w3 = w3.at[:H2, :H3].set(params["wi3"])
    w3 = w3.at[H2p:H2p + H3, :H3].set(params["wh3"])
    b3 = jnp.pad(params["bi3"] + params["bh3"], ((0, 0), (0, H3p - H3)))

    # precomputed adaptation decays (no per-step transcendentals in kernel)
    ro1 = jnp.exp(-DT / jnp.pad(params["ta1"], ((0, 0), (0, H1p - H1)), constant_values=600.0))
    ro2 = jnp.exp(-DT / jnp.pad(params["ta2"], ((0, 0), (0, H2p - H2)), constant_values=600.0))
    ro3 = jnp.exp(-DT / jnp.pad(params["ta3"], ((0, 0), (0, H3p - H3)), constant_values=600.0))

    # ---- BlockSpecs: per-step blocks for x/outputs, resident weights ----
    in_specs = [
        pl.BlockSpec((1, n_block, H1p), lambda b, t: (t, b, 0)),   # xin1
        pl.BlockSpec((H1p, H1p),        lambda b, t: (0, 0)),      # wh1
        pl.BlockSpec((H1p + H2p, H2p),  lambda b, t: (0, 0)),      # w2 fused
        pl.BlockSpec((1, H2p),          lambda b, t: (0, 0)),      # b2 fused
        pl.BlockSpec((H2p + H3p, H3p),  lambda b, t: (0, 0)),      # w3 fused
        pl.BlockSpec((1, H3p),          lambda b, t: (0, 0)),      # b3 fused
        pl.BlockSpec((1, H1p),          lambda b, t: (0, 0)),      # ro1
        pl.BlockSpec((1, H2p),          lambda b, t: (0, 0)),      # ro2
        pl.BlockSpec((1, H3p),          lambda b, t: (0, 0)),      # ro3
    ]

    seq_spec = pl.BlockSpec((1, n_block, H3p), lambda b, t: (t, b, 0))

    def state_spec(_):
        return pl.BlockSpec((n_block, _), lambda b, t: (b, 0))

    out_shape = (
        jax.ShapeDtypeStruct((T, Np, H3p), f32),   # mem3 per step (readout deferred)
        jax.ShapeDtypeStruct((T, Np, H3p), f32),   # spike3 per step (hidden_spike)
        jax.ShapeDtypeStruct((Np, H1p), f32),      # final mem1
        jax.ShapeDtypeStruct((Np, H2p), f32),      # final mem2
        jax.ShapeDtypeStruct((Np, H3p), f32),      # final mem3
        jax.ShapeDtypeStruct((Np, H1p), f32),      # final spike1
        jax.ShapeDtypeStruct((Np, H2p), f32),      # final spike2
        jax.ShapeDtypeStruct((Np, H3p), f32),      # final spike3
        jax.ShapeDtypeStruct((Np, H1p), f32),      # final b1
        jax.ShapeDtypeStruct((Np, H2p), f32),      # final b2
        jax.ShapeDtypeStruct((Np, H3p), f32),      # final b3
    )

    out_specs = [
        seq_spec, seq_spec,
        state_spec(H1p), state_spec(H2p), state_spec(H3p),
        state_spec(H1p), state_spec(H2p), state_spec(H3p),
        state_spec(H1p), state_spec(H2p), state_spec(H3p),
    ]

    scratch_shapes = [
        pltpu.VMEM((n_block, H1p), f32), pltpu.VMEM((n_block, H1p), f32), pltpu.VMEM((n_block, H1p), f32),
        pltpu.VMEM((n_block, H2p), f32), pltpu.VMEM((n_block, H2p), f32), pltpu.VMEM((n_block, H2p), f32),
        pltpu.VMEM((n_block, H3p), f32), pltpu.VMEM((n_block, H3p), f32), pltpu.VMEM((n_block, H3p), f32),
    ]

    grid_spec = pltpu.PrefetchScalarGridSpec(
        num_scalar_prefetch=0,
        grid=(NB, T),                      # batch blocks parallel, time serial
        in_specs=in_specs,
        out_specs=out_specs,
        scratch_shapes=scratch_shapes,
    )

    results = pl.pallas_call(
        lsnn_step_kernel,
        out_shape=out_shape,
        grid_spec=grid_spec,
        compiler_params=pltpu.CompilerParams(
            dimension_semantics=("parallel", "arbitrary"),
            vmem_limit_bytes=32 * 1024 * 1024,
        ),
    )(xin1, wh1, w2, b2, w3, b3, ro1, ro2, ro3)

    (mem3_seq, sp3_seq,
     fm1, fm2, fm3, fs1, fs2, fs3, fb1, fb2, fb3) = results

    # ---- deferred readout: one (T*N, H3) x (H3, OUT) matmul ----
    mem3_tn = mem3_seq[:, :N, :H3]                                  # (T, N, H3)
    out_tm = (mem3_tn.reshape(T * N, H3) @ params["wo"]
              + params["bo"]).reshape(T, N, OUT)
    output = jnp.transpose(out_tm, (1, 0, 2))                       # (N, T, OUT)
    hidden_spike = jnp.transpose(sp3_seq[:, :N, :H3], (1, 0, 2))    # (N, T, H3)

    # strip padding from final state
    fm1, fm2, fm3 = fm1[:N, :H1], fm2[:N, :H2], fm3[:N, :H3]
    fs1, fs2, fs3 = fs1[:N, :H1], fs2[:N, :H2], fs3[:N, :H3]
    fb1, fb2, fb3 = fb1[:N, :H1], fb2[:N, :H2], fb3[:N, :H3]

    # fire_rate from final-step spikes, exactly as in the PyTorch module
    n_nonzeros = (jnp.count_nonzero(fs1) + jnp.count_nonzero(fs2)
                  + jnp.count_nonzero(fs3))
    n_neurons = fs1.size + fs2.size + fs3.size
    fire_rate = n_nonzeros / n_neurons

    final_state = {
        "mem_list": [fm1, fm2, fm3],
        "spike_list": [fs1, fs2, fs3],
        "b_list": [fb1, fb2, fb3],
    }
    return output, final_state, fire_rate, hidden_spike


# ---------------------------------------------------------------------------
# Deterministic parameter construction (glue)
# ---------------------------------------------------------------------------
def xavier_uniform(key, fan_in, fan_out):
    bound = np.sqrt(6.0 / (fan_in + fan_out))
    return jax.random.uniform(key, (fan_in, fan_out), jnp.float32, -bound, bound)


def make_params(key, in_size, cfg_fc, n_out):
    h1, h2, h3 = cfg_fc
    keys = jax.random.split(key, 7)
    orth = jax.nn.initializers.orthogonal()
    params = {
        "wi1": xavier_uniform(keys[0], in_size, h1), "bi1": jnp.zeros((1, h1), jnp.float32),
        "wh1": orth(keys[1], (h1, h1), jnp.float32), "bh1": jnp.zeros((1, h1), jnp.float32),
        "wi2": xavier_uniform(keys[2], h1, h2),      "bi2": jnp.zeros((1, h2), jnp.float32),
        "wh2": orth(keys[3], (h2, h2), jnp.float32), "bh2": jnp.zeros((1, h2), jnp.float32),
        "wi3": xavier_uniform(keys[4], h2, h3),      "bi3": jnp.zeros((1, h3), jnp.float32),
        "wh3": orth(keys[5], (h3, h3), jnp.float32), "bh3": jnp.zeros((1, h3), jnp.float32),
        "wo":  xavier_uniform(keys[6], h3, n_out),   "bo":  jnp.zeros((1, n_out), jnp.float32),
        "ta1": jnp.full((1, h1), 600.0, jnp.float32),   # tau_adp init = 600
        "ta2": jnp.full((1, h2), 600.0, jnp.float32),
        "ta3": jnp.full((1, h3), 600.0, jnp.float32),
    }
    return params


if __name__ == "__main__":
    # small shapes consistent with the module's forward
    N, T, IN = 2, 8, 16
    cfg_fc = (32, 32, 32)
    n_out = 4

    key = jax.random.PRNGKey(0)
    kx, kp = jax.random.split(key)
    x = jax.random.normal(kx, (N, T, IN), jnp.float32)
    params = make_params(kp, IN, cfg_fc, n_out)

    # TODO(synk): ActFun_adp's surrogate gradient (backward) is not represented;
    # this kernel implements the forward (hard Heaviside) pass only.
    output, final_state, fire_rate, hidden_spike = lsnn_alif_forward(x, params)
    jax.block_until_ready(output)
    jax.block_until_ready(hidden_spike)
    jax.block_until_ready(fire_rate)

    assert output.shape == (N, T, n_out)
    assert hidden_spike.shape == (N, T, cfg_fc[2])
    assert final_state["mem_list"][0].shape == (N, cfg_fc[0])
    assert final_state["b_list"][2].shape == (N, cfg_fc[2])
    assert bool(jnp.all(jnp.isfinite(output)))
    assert bool(jnp.isfinite(fire_rate))

    print("KERNEL_OK")
</pallas_src>

<mosaic_0001>
module attributes {stable_mosaic.version = 11 : i64} {
  func.func @lsnn_step_kernel(%arg0: i32, %arg1: i32, %arg2: memref<1x8x128xf32, #tpu.memory_space<vmem>>, %arg3: memref<128x128xf32, #tpu.memory_space<vmem>>, %arg4: memref<256x128xf32, #tpu.memory_space<vmem>>, %arg5: memref<1x128xf32, #tpu.memory_space<vmem>>, %arg6: memref<256x128xf32, #tpu.memory_space<vmem>>, %arg7: memref<1x128xf32, #tpu.memory_space<vmem>>, %arg8: memref<1x128xf32, #tpu.memory_space<vmem>>, %arg9: memref<1x128xf32, #tpu.memory_space<vmem>>, %arg10: memref<1x128xf32, #tpu.memory_space<vmem>>, %arg11: memref<1x8x128xf32, #tpu.memory_space<vmem>>, %arg12: memref<1x8x128xf32, #tpu.memory_space<vmem>>, %arg13: memref<8x128xf32, #tpu.memory_space<vmem>>, %arg14: memref<8x128xf32, #tpu.memory_space<vmem>>, %arg15: memref<8x128xf32, #tpu.memory_space<vmem>>, %arg16: memref<8x128xf32, #tpu.memory_space<vmem>>, %arg17: memref<8x128xf32, #tpu.memory_space<vmem>>, %arg18: memref<8x128xf32, #tpu.memory_space<vmem>>, %arg19: memref<8x128xf32, #tpu.memory_space<vmem>>, %arg20: memref<8x128xf32, #tpu.memory_space<vmem>>, %arg21: memref<8x128xf32, #tpu.memory_space<vmem>>, %arg22: memref<8x128xf32, #tpu.memory_space<vmem>>, %arg23: memref<8x128xf32, #tpu.memory_space<vmem>>, %arg24: memref<8x128xf32, #tpu.memory_space<vmem>>, %arg25: memref<8x128xf32, #tpu.memory_space<vmem>>, %arg26: memref<8x128xf32, #tpu.memory_space<vmem>>, %arg27: memref<8x128xf32, #tpu.memory_space<vmem>>, %arg28: memref<8x128xf32, #tpu.memory_space<vmem>>, %arg29: memref<8x128xf32, #tpu.memory_space<vmem>>, %arg30: memref<8x128xf32, #tpu.memory_space<vmem>>) attributes {dimension_semantics = [#tpu.dimension_semantics<parallel>, #tpu.dimension_semantics<arbitrary>], iteration_bounds = array<i64: 1, 8>, scalar_prefetch = 0 : i64, scratch_operands = 9 : i64, tpu.core_type = #tpu.core_type<tc>, window_params = [{transform_indices = @transform_0, window_bounds = array<i64: 1, 8, 128>}, {pipeline_mode = #tpu.pipeline_mode<synchronous>, transform_indices = @transform_1, window_bounds = array<i64: 128, 128>}, {pipeline_mode = #tpu.pipeline_mode<synchronous>, transform_indices = @transform_2, window_bounds = array<i64: 256, 128>}, {pipeline_mode = #tpu.pipeline_mode<synchronous>, transform_indices = @transform_3, window_bounds = array<i64: 1, 128>}, {pipeline_mode = #tpu.pipeline_mode<synchronous>, transform_indices = @transform_4, window_bounds = array<i64: 256, 128>}, {pipeline_mode = #tpu.pipeline_mode<synchronous>, transform_indices = @transform_5, window_bounds = array<i64: 1, 128>}, {pipeline_mode = #tpu.pipeline_mode<synchronous>, transform_indices = @transform_6, window_bounds = array<i64: 1, 128>}, {pipeline_mode = #tpu.pipeline_mode<synchronous>, transform_indices = @transform_7, window_bounds = array<i64: 1, 128>}, {pipeline_mode = #tpu.pipeline_mode<synchronous>, transform_indices = @transform_8, window_bounds = array<i64: 1, 128>}, {transform_indices = @transform_9, window_bounds = array<i64: 1, 8, 128>}, {transform_indices = @transform_10, window_bounds = array<i64: 1, 8, 128>}, {transform_indices = @transform_11, window_bounds = array<i64: 8, 128>}, {transform_indices = @transform_12, window_bounds = array<i64: 8, 128>}, {transform_indices = @transform_13, window_bounds = array<i64: 8, 128>}, {transform_indices = @transform_14, window_bounds = array<i64: 8, 128>}, {transform_indices = @transform_15, window_bounds = array<i64: 8, 128>}, {transform_indices = @transform_16, window_bounds = array<i64: 8, 128>}, {transform_indices = @transform_17, window_bounds = array<i64: 8, 128>}, {transform_indices = @transform_18, window_bounds = array<i64: 8, 128>}, {transform_indices = @transform_19, window_bounds = array<i64: 8, 128>}]} {
    %c0_i32 = arith.constant 0 : i32
    %0 = arith.cmpi eq, %arg1, %c0_i32 : i32
    %1 = arith.extui %0 : i1 to i32
    %c0_i32_0 = arith.constant 0 : i32
    %2 = arith.cmpi ne, %1, %c0_i32_0 : i32
    scf.if %2 {
      %cst_88 = arith.constant 0.000000e+00 : f32
      %122 = vector.broadcast %cst_88 : f32 to vector<8x128xf32>
      %c0_89 = arith.constant 0 : index
      %c0_90 = arith.constant 0 : index
      %123 = vector.load %arg22[%c0_89, %c0_90] : memref<8x128xf32, #tpu.memory_space<vmem>>, vector<8x128xf32>
      tpu.vector_store %arg22[%c0_89, %c0_90], %122 {strides = array<i32>} : memref<8x128xf32, #tpu.memory_space<vmem>>, vector<8x128xf32>,
      %cst_91 = arith.constant 0.000000e+00 : f32
      %124 = vector.broadcast %cst_91 : f32 to vector<8x128xf32>
      %c0_92 = arith.constant 0 : index
      %c0_93 = arith.constant 0 : index
      %125 = vector.load %arg23[%c0_92, %c0_93] : memref<8x128xf32, #tpu.memory_space<vmem>>, vector<8x128xf32>
      tpu.vector_store %arg23[%c0_92, %c0_93], %124 {strides = array<i32>} : memref<8x128xf32, #tpu.memory_space<vmem>>, vector<8x128xf32>,
      %cst_94 = arith.constant 0.00999999977 : f32
      %126 = vector.broadcast %cst_94 : f32 to vector<8x128xf32>
      %c0_95 = arith.constant 0 : index
      %c0_96 = arith.constant 0 : index
      %127 = vector.load %arg24[%c0_95, %c0_96] : memref<8x128xf32, #tpu.memory_space<vmem>>, vector<8x128xf32>
      tpu.vector_store %arg24[%c0_95, %c0_96], %126 {strides = array<i32>} : memref<8x128xf32, #tpu.memory_space<vmem>>, vector<8x128xf32>,
      %cst_97 = arith.constant 0.000000e+00 : f32
      %128 = vector.broadcast %cst_97 : f32 to vector<8x128xf32>
      %c0_98 = arith.constant 0 : index
      %c0_99 = arith.constant 0 : index
      %129 = vector.load %arg25[%c0_98, %c0_99] : memref<8x128xf32, #tpu.memory_space<vmem>>, vector<8x128xf32>
      tpu.vector_store %arg25[%c0_98, %c0_99], %128 {strides = array<i32>} : memref<8x128xf32, #tpu.memory_space<vmem>>, vector<8x128xf32>,
      %cst_100 = arith.constant 0.000000e+00 : f32
      %130 = vector.broadcast %cst_100 : f32 to vector<8x128xf32>
      %c0_101 = arith.constant 0 : index
      %c0_102 = arith.constant 0 : index
      %131 = vector.load %arg26[%c0_101, %c0_102] : memref<8x128xf32, #tpu.memory_space<vmem>>, vector<8x128xf32>
      tpu.vector_store %arg26[%c0_101, %c0_102], %130 {strides = array<i32>} : memref<8x128xf32, #tpu.memory_space<vmem>>, vector<8x128xf32>,
      %cst_103 = arith.constant 0.00999999977 : f32
      %132 = vector.broadcast %cst_103 : f32 to vector<8x128xf32>
      %c0_104 = arith.constant 0 : index
      %c0_105 = arith.constant 0 : index
      %133 = vector.load %arg27[%c0_104, %c0_105] : memref<8x128xf32, #tpu.memory_space<vmem>>, vector<8x128xf32>
      tpu.vector_store %arg27[%c0_104, %c0_105], %132 {strides = array<i32>} : memref<8x128xf32, #tpu.memory_space<vmem>>, vector<8x128xf32>,
      %cst_106 = arith.constant 0.000000e+00 : f32
      %134 = vector.broadcast %cst_106 : f32 to vector<8x128xf32>
      %c0_107 = arith.constant 0 : index
      %c0_108 = arith.constant 0 : index
      %135 = vector.load %arg28[%c0_107, %c0_108] : memref<8x128xf32, #tpu.memory_space<vmem>>, vector<8x128xf32>
      tpu.vector_store %arg28[%c0_107, %c0_108], %134 {strides = array<i32>} : memref<8x128xf32, #tpu.memory_space<vmem>>, vector<8x128xf32>,
      %cst_109 = arith.constant 0.000000e+00 : f32
      %136 = vector.broadcast %cst_109 : f32 to vector<8x128xf32>
      %c0_110 = arith.constant 0 : index
      %c0_111 = arith.constant 0 : index
      %137 = vector.load %arg29[%c0_110, %c0_111] : memref<8x128xf32, #tpu.memory_space<vmem>>, vector<8x128xf32>
      tpu.vector_store %arg29[%c0_110, %c0_111], %136 {strides = array<i32>} : memref<8x128xf32, #tpu.memory_space<vmem>>, vector<8x128xf32>,
      %cst_112 = arith.constant 0.00999999977 : f32
      %138 = vector.broadcast %cst_112 : f32 to vector<8x128xf32>
      %c0_113 = arith.constant 0 : index
      %c0_114 = arith.constant 0 : index
      %139 = vector.load %arg30[%c0_113, %c0_114] : memref<8x128xf32, #tpu.memory_space<vmem>>, vector<8x128xf32>
      tpu.vector_store %arg30[%c0_113, %c0_114], %138 {strides = array<i32>} : memref<8x128xf32, #tpu.memory_space<vmem>>, vector<8x128xf32>,
    } else {
    }
    %c0 = arith.constant 0 : index
    %c0_1 = arith.constant 0 : index
    %c0_2 = arith.constant 0 : index
    %3 = vector.load %arg2[%c0, %c0_1, %c0_2] : memref<1x8x128xf32, #tpu.memory_space<vmem>>, vector<1x8x128xf32>
    %4 = vector.shape_cast %3 : vector<1x8x128xf32> to vector<8x128xf32>
    %c0_3 = arith.constant 0 : index
    %c0_4 = arith.constant 0 : index
    %5 = vector.load %arg23[%c0_3, %c0_4] : memref<8x128xf32, #tpu.memory_space<vmem>>, vector<8x128xf32>
    %c0_5 = arith.constant 0 : index
    %c0_6 = arith.constant 0 : index
    %6 = vector.load %arg3[%c0_5, %c0_6] : memref<128x128xf32, #tpu.memory_space<vmem>>, vector<128x128xf32>
    %cst = arith.constant dense<0.000000e+00> : vector<8x128xf32>
    %7 = tpu.matmul %5, %6, %cst {dimension_numbers = #tpu.dot_dimension_numbers<[1], [0], [0], [1], [0, 0, 1, 1], [], []>} : vector<8x128xf32>, vector<128x128xf32>, vector<8x128xf32> -> vector<8x128xf32>
    %8 = arith.addf %4, %7 : vector<8x128xf32>
    %c0_7 = arith.constant 0 : index
    %c0_8 = arith.constant 0 : index
    %9 = vector.load %arg8[%c0_7, %c0_8] : memref<1x128xf32, #tpu.memory_space<vmem>>, vector<1x128xf32>
    %c0_9 = arith.constant 0 : index
    %c0_10 = arith.constant 0 : index
    %10 = vector.load %arg23[%c0_9, %c0_10] : memref<8x128xf32, #tpu.memory_space<vmem>>, vector<8x128xf32>
    %c0_11 = arith.constant 0 : index
    %c0_12 = arith.constant 0 : index
    %11 = vector.load %arg24[%c0_11, %c0_12] : memref<8x128xf32, #tpu.memory_space<vmem>>, vector<8x128xf32>
    %12 = vector.broadcast %9 : vector<1x128xf32> to vector<8x128xf32>
    %13 = arith.mulf %12, %11 : vector<8x128xf32>
    %cst_13 = arith.constant 1.000000e+00 : f32
    %14 = vector.broadcast %cst_13 : f32 to vector<1x128xf32>
    %15 = arith.subf %14, %9 : vector<1x128xf32>
    %16 = vector.broadcast %15 : vector<1x128xf32> to vector<8x128xf32>
    %17 = arith.mulf %16, %10 : vector<8x128xf32>
    %18 = arith.addf %13, %17 : vector<8x128xf32>
    %cst_14 = arith.constant 1.800000e+00 : f32
    %19 = vector.broadcast %cst_14 : f32 to vector<8x128xf32>
    %20 = arith.mulf %19, %18 : vector<8x128xf32>
    %cst_15 = arith.constant 0.00999999977 : f32
    %21 = vector.broadcast %cst_15 : f32 to vector<8x128xf32>
    %22 = arith.addf %21, %20 : vector<8x128xf32>
    %c0_16 = arith.constant 0 : index
    %c0_17 = arith.constant 0 : index
    %23 = vector.load %arg22[%c0_16, %c0_17] : memref<8x128xf32, #tpu.memory_space<vmem>>, vector<8x128xf32>
    %cst_18 = arith.constant 0.951229453 : f32
    %24 = vector.broadcast %cst_18 : f32 to vector<8x128xf32>
    %25 = arith.mulf %23, %24 : vector<8x128xf32>
    %cst_19 = arith.constant 0.0487705767 : f32
    %26 = vector.broadcast %cst_19 : f32 to vector<8x128xf32>
    %27 = arith.mulf %26, %8 : vector<8x128xf32>
    %28 = arith.addf %25, %27 : vector<8x128xf32>
    %29 = arith.mulf %22, %10 : vector<8x128xf32>
    %30 = arith.subf %28, %29 : vector<8x128xf32>
    %31 = arith.subf %30, %22 : vector<8x128xf32>
    %cst_20 = arith.constant 0.000000e+00 : f32
    %32 = vector.broadcast %cst_20 : f32 to vector<8x128xf32>
    %33 = arith.cmpf ogt, %31, %32 : vector<8x128xf32>
    %34 = arith.extui %33 : vector<8x128xi1> to vector<8x128xi32>
    %35 = arith.sitofp %34 : vector<8x128xi32> to vector<8x128xf32>
    %c0_21 = arith.constant 0 : index
    %c0_22 = arith.constant 0 : index
    %36 = vector.load %arg22[%c0_21, %c0_22] : memref<8x128xf32, #tpu.memory_space<vmem>>, vector<8x128xf32>
    tpu.vector_store %arg22[%c0_21, %c0_22], %30 {strides = array<i32>} : memref<8x128xf32, #tpu.memory_space<vmem>>, vector<8x128xf32>,
    %c0_23 = arith.constant 0 : index
    %c0_24 = arith.constant 0 : index
    %37 = vector.load %arg23[%c0_23, %c0_24] : memref<8x128xf32, #tpu.memory_space<vmem>>, vector<8x128xf32>
    tpu.vector_store %arg23[%c0_23, %c0_24], %35 {strides = array<i32>} : memref<8x128xf32, #tpu.memory_space<vmem>>, vector<8x128xf32>,
    %c0_25 = arith.constant 0 : index
    %c0_26 = arith.constant 0 : index
    %38 = vector.load %arg24[%c0_25, %c0_26] : memref<8x128xf32, #tpu.memory_space<vmem>>, vector<8x128xf32>
    tpu.vector_store %arg24[%c0_25, %c0_26], %18 {strides = array<i32>} : memref<8x128xf32, #tpu.memory_space<vmem>>, vector<8x128xf32>,
    %c0_27 = arith.constant 0 : index
    %c0_28 = arith.constant 0 : index
    %39 = vector.load %arg26[%c0_27, %c0_28] : memref<8x128xf32, #tpu.memory_space<vmem>>, vector<8x128xf32>
    %40 = tpu.concatenate %35, %39 in 1 : vector<8x128xf32>, vector<8x128xf32> -> vector<8x256xf32>
    %c0_29 = arith.constant 0 : index
    %c0_30 = arith.constant 0 : index
    %41 = vector.load %arg4[%c0_29, %c0_30] : memref<256x128xf32, #tpu.memory_space<vmem>>, vector<256x128xf32>
    %cst_31 = arith.constant dense<0.000000e+00> : vector<8x128xf32>
    %42 = tpu.matmul %40, %41, %cst_31 {dimension_numbers = #tpu.dot_dimension_numbers<[1], [0], [0], [1], [0, 0, 1, 1], [], []>} : vector<8x256xf32>, vector<256x128xf32>, vector<8x128xf32> -> vector<8x128xf32>
    %c0_32 = arith.constant 0 : index
    %c0_33 = arith.constant 0 : index
    %43 = vector.load %arg5[%c0_32, %c0_33] : memref<1x128xf32, #tpu.memory_space<vmem>>, vector<1x128xf32>
    %44 = vector.broadcast %43 : vector<1x128xf32> to vector<8x128xf32>
    %45 = arith.addf %42, %44 : vector<8x128xf32>
    %c0_34 = arith.constant 0 : index
    %c0_35 = arith.constant 0 : index
    %46 = vector.load %arg9[%c0_34, %c0_35] : memref<1x128xf32, #tpu.memory_space<vmem>>, vector<1x128xf32>
    %c0_36 = arith.constant 0 : index
    %c0_37 = arith.constant 0 : index
    %47 = vector.load %arg26[%c0_36, %c0_37] : memref<8x128xf32, #tpu.memory_space<vmem>>, vector<8x128xf32>
    %c0_38 = arith.constant 0 : index
    %c0_39 = arith.constant 0 : index
    %48 = vector.load %arg27[%c0_38, %c0_39] : memref<8x128xf32, #tpu.memory_space<vmem>>, vector<8x128xf32>
    %49 = vector.broadcast %46 : vector<1x128xf32> to vector<8x128xf32>
    %50 = arith.mulf %49, %48 : vector<8x128xf32>
    %cst_40 = arith.constant 1.000000e+00 : f32
    %51 = vector.broadcast %cst_40 : f32 to vector<1x128xf32>
    %52 = arith.subf %51, %46 : vector<1x128xf32>
    %53 = vector.broadcast %52 : vector<1x128xf32> to vector<8x128xf32>
    %54 = arith.mulf %53, %47 : vector<8x128xf32>
    %55 = arith.addf %50, %54 : vector<8x128xf32>
    %cst_41 = arith.constant 1.800000e+00 : f32
    %56 = vector.broadcast %cst_41 : f32 to vector<8x128xf32>
    %57 = arith.mulf %56, %55 : vector<8x128xf32>
    %cst_42 = arith.constant 0.00999999977 : f32
    %58 = vector.broadcast %cst_42 : f32 to vector<8x128xf32>
    %59 = arith.addf %58, %57 : vector<8x128xf32>
    %c0_43 = arith.constant 0 : index
    %c0_44 = arith.constant 0 : index
    %60 = vector.load %arg25[%c0_43, %c0_44] : memref<8x128xf32, #tpu.memory_space<vmem>>, vector<8x128xf32>
    %cst_45 = arith.constant 0.951229453 : f32
    %61 = vector.broadcast %cst_45 : f32 to vector<8x128xf32>
    %62 = arith.mulf %60, %61 : vector<8x128xf32>
    %cst_46 = arith.constant 0.0487705767 : f32
    %63 = vector.broadcast %cst_46 : f32 to vector<8x128xf32>
    %64 = arith.mulf %63, %45 : vector<8x128xf32>
    %65 = arith.addf %62, %64 : vector<8x128xf32>
    %66 = arith.mulf %59, %47 : vector<8x128xf32>
    %67 = arith.subf %65, %66 : vector<8x128xf32>
    %68 = arith.subf %67, %59 : vector<8x128xf32>
    %cst_47 = arith.constant 0.000000e+00 : f32
    %69 = vector.broadcast %cst_47 : f32 to vector<8x128xf32>
    %70 = arith.cmpf ogt, %68, %69 : vector<8x128xf32>
    %71 = arith.extui %70 : vector<8x128xi1> to vector<8x128xi32>
    %72 = arith.sitofp %71 : vector<8x128xi32> to vector<8x128xf32>
    %c0_48 = arith.constant 0 : index
    %c0_49 = arith.constant 0 : index
    %73 = vector.load %arg25[%c0_48, %c0_49] : memref<8x128xf32, #tpu.memory_space<vmem>>, vector<8x128xf32>
    tpu.vector_store %arg25[%c0_48, %c0_49], %67 {strides = array<i32>} : memref<8x128xf32, #tpu.memory_space<vmem>>, vector<8x128xf32>,
    %c0_50 = arith.constant 0 : index
    %c0_51 = arith.constant 0 : index
    %74 = vector.load %arg26[%c0_50, %c0_51] : memref<8x128xf32, #tpu.memory_space<vmem>>, vector<8x128xf32>
    tpu.vector_store %arg26[%c0_50, %c0_51], %72 {strides = array<i32>} : memref<8x128xf32, #tpu.memory_space<vmem>>, vector<8x128xf32>,
    %c0_52 = arith.constant 0 : index
    %c0_53 = arith.constant 0 : index
    %75 = vector.load %arg27[%c0_52, %c0_53] : memref<8x128xf32, #tpu.memory_space<vmem>>, vector<8x128xf32>
    tpu.vector_store %arg27[%c0_52, %c0_53], %55 {strides = array<i32>} : memref<8x128xf32, #tpu.memory_space<vmem>>, vector<8x128xf32>,
    %c0_54 = arith.constant 0 : index
    %c0_55 = arith.constant 0 : index
    %76 = vector.load %arg29[%c0_54, %c0_55] : memref<8x128xf32, #tpu.memory_space<vmem>>, vector<8x128xf32>
    %77 = tpu.concatenate %72, %76 in 1 : vector<8x128xf32>, vector<8x128xf32> -> vector<8x256xf32>
    %c0_56 = arith.constant 0 : index
    %c0_57 = arith.constant 0 : index
    %78 = vector.load %arg6[%c0_56, %c0_57] : memref<256x128xf32, #tpu.memory_space<vmem>>, vector<256x128xf32>
    %cst_58 = arith.constant dense<0.000000e+00> : vector<8x128xf32>
    %79 = tpu.matmul %77, %78, %cst_58 {dimension_numbers = #tpu.dot_dimension_numbers<[1], [0], [0], [1], [0, 0, 1, 1], [], []>} : vector<8x256xf32>, vector<256x128xf32>, vector<8x128xf32> -> vector<8x128xf32>
    %c0_59 = arith.constant 0 : index
    %c0_60 = arith.constant 0 : index
    %80 = vector.load %arg7[%c0_59, %c0_60] : memref<1x128xf32, #tpu.memory_space<vmem>>, vector<1x128xf32>
    %81 = vector.broadcast %80 : vector<1x128xf32> to vector<8x128xf32>
    %82 = arith.addf %79, %81 : vector<8x128xf32>
    %c0_61 = arith.constant 0 : index
    %c0_62 = arith.constant 0 : index
    %83 = vector.load %arg10[%c0_61, %c0_62] : memref<1x128xf32, #tpu.memory_space<vmem>>, vector<1x128xf32>
    %c0_63 = arith.constant 0 : index
    %c0_64 = arith.constant 0 : index
    %84 = vector.load %arg29[%c0_63, %c0_64] : memref<8x128xf32, #tpu.memory_space<vmem>>, vector<8x128xf32>
    %c0_65 = arith.constant 0 : index
    %c0_66 = arith.constant 0 : index
    %85 = vector.load %arg30[%c0_65, %c0_66] : memref<8x128xf32, #tpu.memory_space<vmem>>, vector<8x128xf32>
    %86 = vector.broadcast %83 : vector<1x128xf32> to vector<8x128xf32>
    %87 = arith.mulf %86, %85 : vector<8x128xf32>
    %cst_67 = arith.constant 1.000000e+00 : f32
    %88 = vector.broadcast %cst_67 : f32 to vector<1x128xf32>
    %89 = arith.subf %88, %83 : vector<1x128xf32>
    %90 = vector.broadcast %89 : vector<1x128xf32> to vector<8x128xf32>
    %91 = arith.mulf %90, %84 : vector<8x128xf32>
    %92 = arith.addf %87, %91 : vector<8x128xf32>
    %cst_68 = arith.constant 1.800000e+00 : f32
    %93 = vector.broadcast %cst_68 : f32 to vector<8x128xf32>
    %94 = arith.mulf %93, %92 : vector<8x128xf32>
    %cst_69 = arith.constant 0.00999999977 : f32
    %95 = vector.broadcast %cst_69 : f32 to vector<8x128xf32>
    %96 = arith.addf %95, %94 : vector<8x128xf32>
    %c0_70 = arith.constant 0 : index
    %c0_71 = arith.constant 0 : index
    %97 = vector.load %arg28[%c0_70, %c0_71] : memref<8x128xf32, #tpu.memory_space<vmem>>, vector<8x128xf32>
    %cst_72 = arith.constant 0.951229453 : f32
    %98 = vector.broadcast %cst_72 : f32 to vector<8x128xf32>
    %99 = arith.mulf %97, %98 : vector<8x128xf32>
    %cst_73 = arith.constant 0.0487705767 : f32
    %100 = vector.broadcast %cst_73 : f32 to vector<8x128xf32>
    %101 = arith.mulf %100, %82 : vector<8x128xf32>
    %102 = arith.addf %99, %101 : vector<8x128xf32>
    %103 = arith.mulf %96, %84 : vector<8x128xf32>
    %104 = arith.subf %102, %103 : vector<8x128xf32>
    %105 = arith.subf %104, %96 : vector<8x128xf32>
    %cst_74 = arith.constant 0.000000e+00 : f32
    %106 = vector.broadcast %cst_74 : f32 to vector<8x128xf32>
    %107 = arith.cmpf ogt, %105, %106 : vector<8x128xf32>
    %108 = arith.extui %107 : vector<8x128xi1> to vector<8x128xi32>
    %109 = arith.sitofp %108 : vector<8x128xi32> to vector<8x128xf32>
    %c0_75 = arith.constant 0 : index
    %c0_76 = arith.constant 0 : index
    %110 = vector.load %arg28[%c0_75, %c0_76] : memref<8x128xf32, #tpu.memory_space<vmem>>, vector<8x128xf32>
    tpu.vector_store %arg28[%c0_75, %c0_76], %104 {strides = array<i32>} : memref<8x128xf32, #tpu.memory_space<vmem>>, vector<8x128xf32>,
    %c0_77 = arith.constant 0 : index
    %c0_78 = arith.constant 0 : index
    %111 = vector.load %arg29[%c0_77, %c0_78] : memref<8x128xf32, #tpu.memory_space<vmem>>, vector<8x128xf32>
    tpu.vector_store %arg29[%c0_77, %c0_78], %109 {strides = array<i32>} : memref<8x128xf32, #tpu.memory_space<vmem>>, vector<8x128xf32>,
    %c0_79 = arith.constant 0 : index
    %c0_80 = arith.constant 0 : index
    %112 = vector.load %arg30[%c0_79, %c0_80] : memref<8x128xf32, #tpu.memory_space<vmem>>, vector<8x128xf32>
    tpu.vector_store %arg30[%c0_79, %c0_80], %92 {strides = array<i32>} : memref<8x128xf32, #tpu.memory_space<vmem>>, vector<8x128xf32>,
    %c0_81 = arith.constant 0 : index
    %c0_82 = arith.constant 0 : index
    %c0_83 = arith.constant 0 : index
    %113 = vector.load %arg11[%c0_81, %c0_82, %c0_83] : memref<1x8x128xf32, #tpu.memory_space<vmem>>, vector<1x8x128xf32>
    %114 = vector.shape_cast %113 : vector<1x8x128xf32> to vector<8x128xf32>
    %115 = vector.shape_cast %104 : vector<8x128xf32> to vector<1x8x128xf32>
    tpu.vector_store %arg11[%c0_81, %c0_82, %c0_83], %115 {strides = array<i32>} : memref<1x8x128xf32, #tpu.memory_space<vmem>>, vector<1x8x128xf32>,
    %c0_84 = arith.constant 0 : index
    %c0_85 = arith.constant 0 : index
    %c0_86 = arith.constant 0 : index
    %116 = vector.load %arg12[%c0_84, %c0_85, %c0_86] : memref<1x8x128xf32, #tpu.memory_space<vmem>>, vector<1x8x128xf32>
    %117 = vector.shape_cast %116 : vector<1x8x128xf32> to vector<8x128xf32>
    %118 = vector.shape_cast %109 : vector<8x128xf32> to vector<1x8x128xf32>
    tpu.vector_store %arg12[%c0_84, %c0_85, %c0_86], %118 {strides = array<i32>} : memref<1x8x128xf32, #tpu.memory_space<vmem>>, vector<1x8x128xf32>,
    %c7_i32 = arith.constant 7 : i32
    %119 = arith.cmpi eq, %arg1, %c7_i32 : i32
    %120 = arith.extui %119 : i1 to i32
    %c0_i32_87 = arith.constant 0 : i32
    %121 = arith.cmpi ne, %120, %c0_i32_87 : i32
    scf.if %121 {
      %c0_88 = arith.constant 0 : index
      %c0_89 = arith.constant 0 : index
      %122 = vector.load %arg22[%c0_88, %c0_89] : memref<8x128xf32, #tpu.memory_space<vmem>>, vector<8x128xf32>
      %c0_90 = arith.constant 0 : index
      %c0_91 = arith.constant 0 : index
      %123 = vector.load %arg13[%c0_90, %c0_91] : memref<8x128xf32, #tpu.memory_space<vmem>>, vector<8x128xf32>
      tpu.vector_store %arg13[%c0_90, %c0_91], %122 {strides = array<i32>} : memref<8x128xf32, #tpu.memory_space<vmem>>, vector<8x128xf32>,
      %c0_92 = arith.constant 0 : index
      %c0_93 = arith.constant 0 : index
      %124 = vector.load %arg25[%c0_92, %c0_93] : memref<8x128xf32, #tpu.memory_space<vmem>>, vector<8x128xf32>
      %c0_94 = arith.constant 0 : index
      %c0_95 = arith.constant 0 : index
      %125 = vector.load %arg14[%c0_94, %c0_95] : memref<8x128xf32, #tpu.memory_space<vmem>>, vector<8x128xf32>
      tpu.vector_store %arg14[%c0_94, %c0_95], %124 {strides = array<i32>} : memref<8x128xf32, #tpu.memory_space<vmem>>, vector<8x128xf32>,
      %c0_96 = arith.constant 0 : index
      %c0_97 = arith.constant 0 : index
      %126 = vector.load %arg28[%c0_96, %c0_97] : memref<8x128xf32, #tpu.memory_space<vmem>>, vector<8x128xf32>
      %c0_98 = arith.constant 0 : index
      %c0_99 = arith.constant 0 : index
      %127 = vector.load %arg15[%c0_98, %c0_99] : memref<8x128xf32, #tpu.memory_space<vmem>>, vector<8x128xf32>
      tpu.vector_store %arg15[%c0_98, %c0_99], %126 {strides = array<i32>} : memref<8x128xf32, #tpu.memory_space<vmem>>, vector<8x128xf32>,
      %c0_100 = arith.constant 0 : index
      %c0_101 = arith.constant 0 : index
      %128 = vector.load %arg23[%c0_100, %c0_101] : memref<8x128xf32, #tpu.memory_space<vmem>>, vector<8x128xf32>
      %c0_102 = arith.constant 0 : index
      %c0_103 = arith.constant 0 : index
      %129 = vector.load %arg16[%c0_102, %c0_103] : memref<8x128xf32, #tpu.memory_space<vmem>>, vector<8x128xf32>
      tpu.vector_store %arg16[%c0_102, %c0_103], %128 {strides = array<i32>} : memref<8x128xf32, #tpu.memory_space<vmem>>, vector<8x128xf32>,
      %c0_104 = arith.constant 0 : index
      %c0_105 = arith.constant 0 : index
      %130 = vector.load %arg26[%c0_104, %c0_105] : memref<8x128xf32, #tpu.memory_space<vmem>>, vector<8x128xf32>
      %c0_106 = arith.constant 0 : index
      %c0_107 = arith.constant 0 : index
      %131 = vector.load %arg17[%c0_106, %c0_107] : memref<8x128xf32, #tpu.memory_space<vmem>>, vector<8x128xf32>
      tpu.vector_store %arg17[%c0_106, %c0_107], %130 {strides = array<i32>} : memref<8x128xf32, #tpu.memory_space<vmem>>, vector<8x128xf32>,
      %c0_108 = arith.constant 0 : index
      %c0_109 = arith.constant 0 : index
      %132 = vector.load %arg29[%c0_108, %c0_109] : memref<8x128xf32, #tpu.memory_space<vmem>>, vector<8x128xf32>
      %c0_110 = arith.constant 0 : index
      %c0_111 = arith.constant 0 : index
      %133 = vector.load %arg18[%c0_110, %c0_111] : memref<8x128xf32, #tpu.memory_space<vmem>>, vector<8x128xf32>
      tpu.vector_store %arg18[%c0_110, %c0_111], %132 {strides = array<i32>} : memref<8x128xf32, #tpu.memory_space<vmem>>, vector<8x128xf32>,
      %c0_112 = arith.constant 0 : index
      %c0_113 = arith.constant 0 : index
      %134 = vector.load %arg24[%c0_112, %c0_113] : memref<8x128xf32, #tpu.memory_space<vmem>>, vector<8x128xf32>
      %c0_114 = arith.constant 0 : index
      %c0_115 = arith.constant 0 : index
      %135 = vector.load %arg19[%c0_114, %c0_115] : memref<8x128xf32, #tpu.memory_space<vmem>>, vector<8x128xf32>
      tpu.vector_store %arg19[%c0_114, %c0_115], %134 {strides = array<i32>} : memref<8x128xf32, #tpu.memory_space<vmem>>, vector<8x128xf32>,
      %c0_116 = arith.constant 0 : index
      %c0_117 = arith.constant 0 : index
      %136 = vector.load %arg27[%c0_116, %c0_117] : memref<8x128xf32, #tpu.memory_space<vmem>>, vector<8x128xf32>
      %c0_118 = arith.constant 0 : index
      %c0_119 = arith.constant 0 : index
      %137 = vector.load %arg20[%c0_118, %c0_119] : memref<8x128xf32, #tpu.memory_space<vmem>>, vector<8x128xf32>
      tpu.vector_store %arg20[%c0_118, %c0_119], %136 {strides = array<i32>} : memref<8x128xf32, #tpu.memory_space<vmem>>, vector<8x128xf32>,
      %c0_120 = arith.constant 0 : index
      %c0_121 = arith.constant 0 : index
      %138 = vector.load %arg30[%c0_120, %c0_121] : memref<8x128xf32, #tpu.memory_space<vmem>>, vector<8x128xf32>
      %c0_122 = arith.constant 0 : index
      %c0_123 = arith.constant 0 : index
      %139 = vector.load %arg21[%c0_122, %c0_123] : memref<8x128xf32, #tpu.memory_space<vmem>>, vector<8x128xf32>
      tpu.vector_store %arg21[%c0_122, %c0_123], %138 {strides = array<i32>} : memref<8x128xf32, #tpu.memory_space<vmem>>, vector<8x128xf32>,
    } else {
    }
    return
  }
  func.func @transform_0(%arg0: i32, %arg1: i32) -> (i32, i32, i32) {
    %c0_i32 = arith.constant 0 : i32
    %c0_i32_0 = arith.constant 0 : i32
    return %arg1, %arg0, %c0_i32 : i32, i32, i32
  }
  func.func @transform_1(%arg0: i32, %arg1: i32) -> (i32, i32) {
    %c0_i32 = arith.constant 0 : i32
    %c0_i32_0 = arith.constant 0 : i32
    %c0_i32_1 = arith.constant 0 : i32
    return %c0_i32, %c0_i32_0 : i32, i32
  }
  func.func @transform_2(%arg0: i32, %arg1: i32) -> (i32, i32) {
    %c0_i32 = arith.constant 0 : i32
    %c0_i32_0 = arith.constant 0 : i32
    %c0_i32_1 = arith.constant 0 : i32
    return %c0_i32, %c0_i32_0 : i32, i32
  }
  func.func @transform_3(%arg0: i32, %arg1: i32) -> (i32, i32) {
    %c0_i32 = arith.constant 0 : i32
    %c0_i32_0 = arith.constant 0 : i32
    %c0_i32_1 = arith.constant 0 : i32
    return %c0_i32, %c0_i32_0 : i32, i32
  }
  func.func @transform_4(%arg0: i32, %arg1: i32) -> (i32, i32) {
    %c0_i32 = arith.constant 0 : i32
    %c0_i32_0 = arith.constant 0 : i32
    %c0_i32_1 = arith.constant 0 : i32
    return %c0_i32, %c0_i32_0 : i32, i32
  }
  func.func @transform_5(%arg0: i32, %arg1: i32) -> (i32, i32) {
    %c0_i32 = arith.constant 0 : i32
    %c0_i32_0 = arith.constant 0 : i32
    %c0_i32_1 = arith.constant 0 : i32
    return %c0_i32, %c0_i32_0 : i32, i32
  }
  func.func @transform_6(%arg0: i32, %arg1: i32) -> (i32, i32) {
    %c0_i32 = arith.constant 0 : i32
    %c0_i32_0 = arith.constant 0 : i32
    %c0_i32_1 = arith.constant 0 : i32
    return %c0_i32, %c0_i32_0 : i32, i32
  }
  func.func @transform_7(%arg0: i32, %arg1: i32) -> (i32, i32) {
    %c0_i32 = arith.constant 0 : i32
    %c0_i32_0 = arith.constant 0 : i32
    %c0_i32_1 = arith.constant 0 : i32
    return %c0_i32, %c0_i32_0 : i32, i32
  }
  func.func @transform_8(%arg0: i32, %arg1: i32) -> (i32, i32) {
    %c0_i32 = arith.constant 0 : i32
    %c0_i32_0 = arith.constant 0 : i32
    %c0_i32_1 = arith.constant 0 : i32
    return %c0_i32, %c0_i32_0 : i32, i32
  }
  func.func @transform_9(%arg0: i32, %arg1: i32) -> (i32, i32, i32) {
    %c0_i32 = arith.constant 0 : i32
    %c0_i32_0 = arith.constant 0 : i32
    return %arg1, %arg0, %c0_i32 : i32, i32, i32
  }
  func.func @transform_10(%arg0: i32, %arg1: i32) -> (i32, i32, i32) {
    %c0_i32 = arith.constant 0 : i32
    %c0_i32_0 = arith.constant 0 : i32
    return %arg1, %arg0, %c0_i32 : i32, i32, i32
  }
  func.func @transform_11(%arg0: i32, %arg1: i32) -> (i32, i32) {
    %c0_i32 = arith.constant 0 : i32
    %c0_i32_0 = arith.constant 0 : i32
    return %arg0, %c0_i32 : i32, i32
  }
  func.func @transform_12(%arg0: i32, %arg1: i32) -> (i32, i32) {
    %c0_i32 = arith.constant 0 : i32
    %c0_i32_0 = arith.constant 0 : i32
    return %arg0, %c0_i32 : i32, i32
  }
  func.func @transform_13(%arg0: i32, %arg1: i32) -> (i32, i32) {
    %c0_i32 = arith.constant 0 : i32
    %c0_i32_0 = arith.constant 0 : i32
    return %arg0, %c0_i32 : i32, i32
  }
  func.func @transform_14(%arg0: i32, %arg1: i32) -> (i32, i32) {
    %c0_i32 = arith.constant 0 : i32
    %c0_i32_0 = arith.constant 0 : i32
    return %arg0, %c0_i32 : i32, i32
  }
  func.func @transform_15(%arg0: i32, %arg1: i32) -> (i32, i32) {
    %c0_i32 = arith.constant 0 : i32
    %c0_i32_0 = arith.constant 0 : i32
    return %arg0, %c0_i32 : i32, i32
  }
  func.func @transform_16(%arg0: i32, %arg1: i32) -> (i32, i32) {
    %c0_i32 = arith.constant 0 : i32
    %c0_i32_0 = arith.constant 0 : i32
    return %arg0, %c0_i32 : i32, i32
  }
  func.func @transform_17(%arg0: i32, %arg1: i32) -> (i32, i32) {
    %c0_i32 = arith.constant 0 : i32
    %c0_i32_0 = arith.constant 0 : i32
    return %arg0, %c0_i32 : i32, i32
  }
  func.func @transform_18(%arg0: i32, %arg1: i32) -> (i32, i32) {
    %c0_i32 = arith.constant 0 : i32
    %c0_i32_0 = arith.constant 0 : i32
    return %arg0, %c0_i32 : i32, i32
  }
  func.func @transform_19(%arg0: i32, %arg1: i32) -> (i32, i32) {
    %c0_i32 = arith.constant 0 : i32
    %c0_i32_0 = arith.constant 0 : i32
    return %arg0, %c0_i32 : i32, i32
  }
}

</mosaic_0001>

<llo_original>
// kernel: tpu_custom_call.1
$region0: #{tpu_custom_call.1}
  #allocation0 [shape = 'u32[]', space=smem, size = 0x4, offset = 0x4, fixed_abs, tag = 'smem constant byte address 0x4 - core index']
  #allocation1 [shape = 'u32[144,128]{1,0:T(1,128)}', space=vmem, size = 0x12000, scoped, tag = 'internal scratch']
  #allocation2 [shape = 'f32[8,128]{1,0:T(8,128)}', space=vmem, size = 0x1000, scoped, tag = 'scratch operand']
  #allocation3 [shape = 'f32[8,128]{1,0:T(8,128)}', space=vmem, size = 0x1000, scoped, tag = 'scratch operand']
  #allocation4 [shape = 'f32[8,128]{1,0:T(8,128)}', space=vmem, size = 0x1000, scoped, tag = 'scratch operand']
  #allocation5 [shape = 'f32[8,128]{1,0:T(8,128)}', space=vmem, size = 0x1000, scoped, tag = 'scratch operand']
  #allocation6 [shape = 'f32[8,128]{1,0:T(8,128)}', space=vmem, size = 0x1000, scoped, tag = 'scratch operand']
  #allocation7 [shape = 'f32[8,128]{1,0:T(8,128)}', space=vmem, size = 0x1000, scoped, tag = 'scratch operand']
  #allocation8 [shape = 'f32[8,128]{1,0:T(8,128)}', space=vmem, size = 0x1000, scoped, tag = 'scratch operand']
  #allocation9 [shape = 'f32[8,128]{1,0:T(8,128)}', space=vmem, size = 0x1000, scoped, tag = 'scratch operand']
  #allocation10 [shape = 'f32[8,128]{1,0:T(8,128)}', space=vmem, size = 0x1000, scoped, tag = 'scratch operand']
  %s0 = inlined_call_operand.hbm [shape: f32[8,8,128], index: 0, kind: input, shape index: {}]
  %s1 = inlined_call_operand.hbm [shape: f32[128,128], index: 1, kind: input, shape index: {}]
  %s2 = inlined_call_operand.hbm [shape: f32[256,128], index: 2, kind: input, shape index: {}]
  %s3 = inlined_call_operand.vmem [shape: f32[1,128], index: 3, kind: input, shape index: {}]
  %s4 = inlined_call_operand.hbm [shape: f32[256,128], index: 4, kind: input, shape index: {}]
  %s5 = inlined_call_operand.vmem [shape: f32[1,128], index: 5, kind: input, shape index: {}]
  %s6 = inlined_call_operand.vmem [shape: f32[1,128], index: 6, kind: input, shape index: {}]
  %s7 = inlined_call_operand.vmem [shape: f32[1,128], index: 7, kind: input, shape index: {}]
  %s8 = inlined_call_operand.vmem [shape: f32[1,128], index: 8, kind: input, shape index: {}]
  %s9 = inlined_call_operand.hbm [shape: f32[8,8,128], index: 9, kind: output, shape index: {0}]
  %s10 = inlined_call_operand.hbm [shape: f32[8,8,128], index: 10, kind: output, shape index: {1}]
  %s11 = inlined_call_operand.hbm [shape: f32[8,128], index: 11, kind: output, shape index: {2}]
  %s12 = inlined_call_operand.hbm [shape: f32[8,128], index: 12, kind: output, shape index: {3}]
  %s13 = inlined_call_operand.hbm [shape: f32[8,128], index: 13, kind: output, shape index: {4}]
  %s14 = inlined_call_operand.hbm [shape: f32[8,128], index: 14, kind: output, shape index: {5}]
  %s15 = inlined_call_operand.hbm [shape: f32[8,128], index: 15, kind: output, shape index: {6}]
  %s16 = inlined_call_operand.hbm [shape: f32[8,128], index: 16, kind: output, shape index: {7}]
  %s17 = inlined_call_operand.hbm [shape: f32[8,128], index: 17, kind: output, shape index: {8}]
  %s18 = inlined_call_operand.hbm [shape: f32[8,128], index: 18, kind: output, shape index: {9}]
  %s19 = inlined_call_operand.hbm [shape: f32[8,128], index: 19, kind: output, shape index: {10}]
  %20 = xla_tuple %s9, %s10, %s11, %s12, %s13, %s14, %s15, %s16, %s17, %s18, %s19
  %s21 = sld [smem:[#allocation0]]
  $region173: #{tpu_custom_call.1} parent=0
    _
  %s23 = ssub.s32 1, %s21
  %s24 = scalar_select 0, %s23, %s21
  $region1: #{tpu_custom_call.1} parent=0
    #allocation11 [shape = 'u8[8192]{0}', space=vmem, size = 0x2000, scoped, tag = 'input window, operand 0']
    #allocation12 [shape = 's32[2]{0}', space=sflag, size = 0x8, scoped, tag = 'scoped memory for tpu_custom_call.1']
    #allocation13 [shape = 's32[2]{0}', space=sflag, size = 0x8, scoped, tag = 'scoped memory for tpu_custom_call.1']
    #allocation14 [shape = 'u8[65536]{0}', space=vmem, size = 0x10000, scoped, tag = 'input window, operand 1, single buffered']
    #allocation15 [shape = 's32[1]{0}', space=sflag, size = 0x4, scoped, tag = 'scoped memory for tpu_custom_call.1']
    #allocation16 [shape = 'u8[131072]{0}', space=vmem, size = 0x20000, scoped, tag = 'input window, operand 2, single buffered']
    #allocation17 [shape = 'u8[131072]{0}', space=vmem, size = 0x20000, scoped, tag = 'input window, operand 4, single buffered']
    #allocation18 [shape = 's32[1]{0}', space=sflag, size = 0x4, scoped, tag = 'scoped memory for tpu_custom_call.1']
    #allocation19 [shape = 'u8[8192]{0}', space=vmem, size = 0x2000, scoped, tag = 'output window, operand 0']
    #allocation20 [shape = 'u8[8192]{0}', space=vmem, size = 0x2000, scoped, tag = 'output window, operand 1']
    #allocation21 [shape = 's32[2]{0}', space=sflag, size = 0x8, scoped, tag = 'scoped memory for tpu_custom_call.1']
    #allocation22 [shape = 'u8[4096]{0}', space=vmem, size = 0x1000, scoped, tag = 'output window, operand 2, single buffered']
    #allocation23 [shape = 'u8[4096]{0}', space=vmem, size = 0x1000, scoped, tag = 'output window, operand 3, single buffered']
    #allocation24 [shape = 's32[1]{0}', space=sflag, size = 0x4, scoped, tag = 'scoped memory for tpu_custom_call.1']
    #allocation25 [shape = 'u8[4096]{0}', space=vmem, size = 0x1000, scoped, tag = 'output window, operand 4, single buffered']
    #allocation26 [shape = 'u8[4096]{0}', space=vmem, size = 0x1000, scoped, tag = 'output window, operand 5, single buffered']
    #allocation27 [shape = 's32[1]{0}', space=sflag, size = 0x4, scoped, tag = 'scoped memory for tpu_custom_call.1']
    #allocation28 [shape = 'u8[4096]{0}', space=vmem, size = 0x1000, scoped, tag = 'output window, operand 6, single buffered']
    #allocation29 [shape = 'u8[4096]{0}', space=vmem, size = 0x1000, scoped, tag = 'output window, operand 7, single buffered']
    #allocation30 [shape = 's32[1]{0}', space=sflag, size = 0x4, scoped, tag = 'scoped memory for tpu_custom_call.1']
    #allocation31 [shape = 'u8[4096]{0}', space=vmem, size = 0x1000, scoped, tag = 'output window, operand 8, single buffered']
    #allocation32 [shape = 'u8[4096]{0}', space=vmem, size = 0x1000, scoped, tag = 'output window, operand 9, single buffered']
    #allocation33 [shape = 's32[1]{0}', space=sflag, size = 0x4, scoped, tag = 'scoped memory for tpu_custom_call.1']
    #allocation34 [shape = 'u8[4096]{0}', space=vmem, size = 0x1000, scoped, tag = 'output window, operand 10, single buffered']
    %25 = vsyncpa [#allocation12], 0
    %s26 = scalar_lea.sflag [#allocation12], 1
    %27 = vsyncpa %s26, 0
    %28 = vsyncpa [#allocation15], 0
    %29 = vsyncpa [#allocation18], 0
    %30 = vsyncpa [#allocation13], 0
    %s31 = scalar_lea.sflag [#allocation13], 1
    %32 = vsyncpa %s31, 0
    %33 = vsyncpa [#allocation21], 0
    %s34 = scalar_lea.sflag [#allocation21], 1
    %35 = vsyncpa %s34, 0
    %36 = vsyncpa [#allocation24], 0
    %37 = vsyncpa [#allocation27], 0
    %38 = vsyncpa [#allocation30], 0
    %39 = vsyncpa [#allocation33], 0
    loop: start=0, step=1, limit=10
    $region2: #{tpu_custom_call.1} parent=1 // loop_pre_header
      _
    $region3: #{tpu_custom_call.1} parent=1 // loop_header
      %s41 = sphi 0, %s45
      %p42 = scmp.ge.s32.totalorder %s41, 10
      %s48 = sphi 0, %s60
      %s49 = sphi 0, %s56
      %s50 = sphi 0, %s48
      %s51 = sphi 0, %s49
      %s52 = sphi 0, %s50
      %s53 = sphi 0, %s51
      %s65 = sphi 0, %s67
      %s68 = sphi 0, %s65
      %s69 = sphi 0, %s68
      %s85 = sphi 0, %s69
      %s89 = sphi 0, %s89
      %s91 = sphi 0, %s89
      %s92 = sphi 0, %s91
      %s106 = sphi 0, %s92
      %s110 = sphi 0, %s110
      %s112 = sphi 0, %s110
      %s113 = sphi 0, %s112
      %s127 = sphi 0, %s113
      %s131 = sphi 0, %s131
      %s133 = sphi 0, %s131
      %s134 = sphi 0, %s133
      %s148 = sphi 0, %s134
      %s152 = sphi 0, %s152
      %s154 = sphi 0, %s152
      %s155 = sphi 0, %s154
      %s169 = sphi 0, %s155
      %s173 = sphi 0, %s173
      %s175 = sphi 0, %s173
      %s176 = sphi 0, %s175
      %s190 = sphi 0, %s176
      %s194 = sphi 0, %s194
      %s196 = sphi 0, %s194
      %s197 = sphi 0, %s196
      %s211 = sphi 0, %s197
      %s215 = sphi 0, %s215
      %s217 = sphi 0, %s215
      %s218 = sphi 0, %s217
      %s232 = sphi 0, %s218
      %s236 = sphi 0, %s236
      %s238 = sphi 0, %s236
      %s239 = sphi 0, %s238
      %s253 = sphi 0, %s239
      %s261 = sphi 0, %s263
      %s264 = sphi 0, %s261
      %s265 = sphi 0, %s264
      %s281 = sphi 0, %s265
      %s289 = sphi 0, %s291
      %s292 = sphi 0, %s289
      %s293 = sphi 0, %s292
      %s309 = sphi 0, %s293
      %s315 = sphi 0, %s317
      %s318 = sphi 0, %s315
      %s319 = sphi 0, %s318
      %s335 = sphi 0, %s319
      %s341 = sphi 0, %s343
      %s344 = sphi 0, %s341
      %s345 = sphi 0, %s344
      %s361 = sphi 0, %s345
      %s367 = sphi 0, %s369
      %s370 = sphi 0, %s367
      %s371 = sphi 0, %s370
      %s387 = sphi 0, %s371
      %s393 = sphi 0, %s395
      %s396 = sphi 0, %s393
      %s397 = sphi 0, %s396
      %s413 = sphi 0, %s397
      %s419 = sphi 0, %s421
      %s422 = sphi 0, %s419
      %s423 = sphi 0, %s422
      %s439 = sphi 0, %s423
      %s445 = sphi 0, %s447
      %s448 = sphi 0, %s445
      %s449 = sphi 0, %s448
      %s465 = sphi 0, %s449
      %s471 = sphi 0, %s473
      %s474 = sphi 0, %s471
      %s475 = sphi 0, %s474
      %s491 = sphi 0, %s475
      %s497 = sphi 0, %s499
      %s500 = sphi 0, %s497
      %s501 = sphi 0, %s500
      %s517 = sphi 0, %s501
      %s523 = sphi 0, %s525
      %s526 = sphi 0, %s523
      %s527 = sphi 0, %s526
      %s543 = sphi 0, %s527
    $region4: #{tpu_custom_call.1} parent=1 // loop_header_branch
      %44 = sbr.rel (%p42) target = $region8
    $region5: #{tpu_custom_call.1} parent=1 // loop_body
      %s46 = ssub.s32 %s41, 1
      %s47 = ssub.s32 %s41, 2
      %s54 = sadd.s32 1, %s49
      %p55 = scmp.ge.s32.totalorder %s54, 8
      %s56 = scalar_select %p55, 0, %s54
      %s57 = sadd.s32 1, %s48
      %s58 = scalar_select %p55, %s57, %s48
      %p59 = scmp.ge.s32.totalorder %s58, 1
      %s60 = scalar_select %p59, 0, %s58
      %s61 = ssub.s32 %s49, %s56
      %s62 = ssub.s32 %s48, %s60
      %s63 = sor.u32 %s61, %s62
      %p64 = scmp.eq.s32.totalorder %s63, 0
      %s66 = sadd.s32 %s65, 1
      %s67 = scalar_select %p64, %s65, %s66
      %p70 = pneg %p64
      %p71 = scmp.eq.s32.totalorder %s41, 7
      %p72 = por %p70, %p71
      %p73 = scmp.ne.s32.totalorder %s65, %s68
      %p74 = scmp.eq.s32.totalorder %s41, 0
      %p75 = por %p73, %p74
      %p76 = scmp.ne.s32.totalorder %s65, %s68
      %p77 = scmp.eq.s32.totalorder %s46, 7
      %p78 = por %p76, %p77
      %p79 = scmp.ne.s32.totalorder %s68, %s69
      %p80 = scmp.eq.s32.totalorder %s46, 0
      %p81 = por %p79, %p80
      %p82 = scmp.ne.s32.totalorder %s68, %s69
      %p83 = scmp.eq.s32.totalorder %s47, 7
      %p84 = por %p82, %p83
      %p86 = scmp.ne.s32.totalorder %s69, %s85
      %p87 = scmp.eq.s32.totalorder %s47, 0
      %p88 = por %p86, %p87
      %s90 = sadd.s32 %s89, 1
      %p93 = scmp.eq.s32.totalorder %s41, 7
      %p94 = scmp.ne.s32.totalorder %s89, %s91
      %p95 = scmp.eq.s32.totalorder %s41, 0
      %p96 = por %p94, %p95
      %p97 = scmp.ne.s32.totalorder %s89, %s91
      %p98 = scmp.eq.s32.totalorder %s46, 7
      %p99 = por %p97, %p98
      %p100 = scmp.ne.s32.totalorder %s91, %s92
      %p101 = scmp.eq.s32.totalorder %s46, 0
      %p102 = por %p100, %p101
      %p103 = scmp.ne.s32.totalorder %s91, %s92
      %p104 = scmp.eq.s32.totalorder %s47, 7
      %p105 = por %p103, %p104
      %p107 = scmp.ne.s32.totalorder %s92, %s106
      %p108 = scmp.eq.s32.totalorder %s47, 0
      %p109 = por %p107, %p108
      %s111 = sadd.s32 %s110, 1
      %p114 = scmp.eq.s32.totalorder %s41, 7
      %p115 = scmp.ne.s32.totalorder %s110, %s112
      %p116 = scmp.eq.s32.totalorder %s41, 0
      %p117 = por %p115, %p116
      %p118 = scmp.ne.s32.totalorder %s110, %s112
      %p119 = scmp.eq.s32.totalorder %s46, 7
      %p120 = por %p118, %p119
      %p121 = scmp.ne.s32.totalorder %s112, %s113
      %p122 = scmp.eq.s32.totalorder %s46, 0
      %p123 = por %p121, %p122
      %p124 = scmp.ne.s32.totalorder %s112, %s113
      %p125 = scmp.eq.s32.totalorder %s47, 7
      %p126 = por %p124, %p125
      %p128 = scmp.ne.s32.totalorder %s113, %s127
      %p129 = scmp.eq.s32.totalorder %s47, 0
      %p130 = por %p128, %p129
      %s132 = sadd.s32 %s131, 1
      %p135 = scmp.eq.s32.totalorder %s41, 7
      %p136 = scmp.ne.s32.totalorder %s131, %s133
      %p137 = scmp.eq.s32.totalorder %s41, 0
      %p138 = por %p136, %p137
      %p139 = scmp.ne.s32.totalorder %s131, %s133
      %p140 = scmp.eq.s32.totalorder %s46, 7
      %p141 = por %p139, %p140
      %p142 = scmp.ne.s32.totalorder %s133, %s134
      %p143 = scmp.eq.s32.totalorder %s46, 0
      %p144 = por %p142, %p143
      %p145 = scmp.ne.s32.totalorder %s133, %s134
      %p146 = scmp.eq.s32.totalorder %s47, 7
      %p147 = por %p145, %p146
      %p149 = scmp.ne.s32.totalorder %s134, %s148
      %p150 = scmp.eq.s32.totalorder %s47, 0
      %p151 = por %p149, %p150
      %s153 = sadd.s32 %s152, 1
      %p156 = scmp.eq.s32.totalorder %s41, 7
      %p157 = scmp.ne.s32.totalorder %s152, %s154
      %p158 = scmp.eq.s32.totalorder %s41, 0
      %p159 = por %p157, %p158
      %p160 = scmp.ne.s32.totalorder %s152, %s154
      %p161 = scmp.eq.s32.totalorder %s46, 7
      %p162 = por %p160, %p161
      %p163 = scmp.ne.s32.totalorder %s154, %s155
      %p164 = scmp.eq.s32.totalorder %s46, 0
      %p165 = por %p163, %p164
      %p166 = scmp.ne.s32.totalorder %s154, %s155
      %p167 = scmp.eq.s32.totalorder %s47, 7
      %p168 = por %p166, %p167
      %p170 = scmp.ne.s32.totalorder %s155, %s169
      %p171 = scmp.eq.s32.totalorder %s47, 0
      %p172 = por %p170, %p171
      %s174 = sadd.s32 %s173, 1
      %p177 = scmp.eq.s32.totalorder %s41, 7
      %p178 = scmp.ne.s32.totalorder %s173, %s175
      %p179 = scmp.eq.s32.totalorder %s41, 0
      %p180 = por %p178, %p179
      %p181 = scmp.ne.s32.totalorder %s173, %s175
      %p182 = scmp.eq.s32.totalorder %s46, 7
      %p183 = por %p181, %p182
      %p184 = scmp.ne.s32.totalorder %s175, %s176
      %p185 = scmp.eq.s32.totalorder %s46, 0
      %p186 = por %p184, %p185
      %p187 = scmp.ne.s32.totalorder %s175, %s176
      %p188 = scmp.eq.s32.totalorder %s47, 7
      %p189 = por %p187, %p188
      %p191 = scmp.ne.s32.totalorder %s176, %s190
      %p192 = scmp.eq.s32.totalorder %s47, 0
      %p193 = por %p191, %p192
      %s195 = sadd.s32 %s194, 1
      %p198 = scmp.eq.s32.totalorder %s41, 7
      %p199 = scmp.ne.s32.totalorder %s194, %s196
      %p200 = scmp.eq.s32.totalorder %s41, 0
      %p201 = por %p199, %p200
      %p202 = scmp.ne.s32.totalorder %s194, %s196
      %p203 = scmp.eq.s32.totalorder %s46, 7
      %p204 = por %p202, %p203
      %p205 = scmp.ne.s32.totalorder %s196, %s197
      %p206 = scmp.eq.s32.totalorder %s46, 0
      %p207 = por %p205, %p206
      %p208 = scmp.ne.s32.totalorder %s196, %s197
      %p209 = scmp.eq.s32.totalorder %s47, 7
      %p210 = por %p208, %p209
      %p212 = scmp.ne.s32.totalorder %s197, %s211
      %p213 = scmp.eq.s32.totalorder %s47, 0
      %p214 = por %p212, %p213
      %s216 = sadd.s32 %s215, 1
      %p219 = scmp.eq.s32.totalorder %s41, 7
      %p220 = scmp.ne.s32.totalorder %s215, %s217
      %p221 = scmp.eq.s32.totalorder %s41, 0
      %p222 = por %p220, %p221
      %p223 = scmp.ne.s32.totalorder %s215, %s217
      %p224 = scmp.eq.s32.totalorder %s46, 7
      %p225 = por %p223, %p224
      %p226 = scmp.ne.s32.totalorder %s217, %s218
      %p227 = scmp.eq.s32.totalorder %s46, 0
      %p228 = por %p226, %p227
      %p229 = scmp.ne.s32.totalorder %s217, %s218
      %p230 = scmp.eq.s32.totalorder %s47, 7
      %p231 = por %p229, %p230
      %p233 = scmp.ne.s32.totalorder %s218, %s232
      %p234 = scmp.eq.s32.totalorder %s47, 0
      %p235 = por %p233, %p234
      %s237 = sadd.s32 %s236, 1
      %p240 = scmp.eq.s32.totalorder %s41, 7
      %p241 = scmp.ne.s32.totalorder %s236, %s238
      %p242 = scmp.eq.s32.totalorder %s41, 0
      %p243 = por %p241, %p242
      %p244 = scmp.ne.s32.totalorder %s236, %s238
      %p245 = scmp.eq.s32.totalorder %s46, 7
      %p246 = por %p244, %p245
      %p247 = scmp.ne.s32.totalorder %s238, %s239
      %p248 = scmp.eq.s32.totalorder %s46, 0
      %p249 = por %p247, %p248
      %p250 = scmp.ne.s32.totalorder %s238, %s239
      %p251 = scmp.eq.s32.totalorder %s47, 7
      %p252 = por %p250, %p251
      %p254 = scmp.ne.s32.totalorder %s239, %s253
      %p255 = scmp.eq.s32.totalorder %s47, 0
      %p256 = por %p254, %p255
      %s257 = ssub.s32 %s49, %s56
      %s258 = ssub.s32 %s48, %s60
      %s259 = sor.u32 %s257, %s258
      %p260 = scmp.eq.s32.totalorder %s259, 0
      %s262 = sadd.s32 %s261, 1
      %s263 = scalar_select %p260, %s261, %s262
      %p266 = pneg %p260
      %p267 = scmp.eq.s32.totalorder %s41, 7
      %p268 = por %p266, %p267
      %p269 = scmp.ne.s32.totalorder %s261, %s264
      %p270 = scmp.eq.s32.totalorder %s41, 0
      %p271 = por %p269, %p270
      %p272 = scmp.ne.s32.totalorder %s261, %s264
      %p273 = scmp.eq.s32.totalorder %s46, 7
      %p274 = por %p272, %p273
      %p275 = scmp.ne.s32.totalorder %s264, %s265
      %p276 = scmp.eq.s32.totalorder %s46, 0
      %p277 = por %p275, %p276
      %p278 = scmp.ne.s32.totalorder %s264, %s265
      %p279 = scmp.eq.s32.totalorder %s47, 7
      %p280 = por %p278, %p279
      %p282 = scmp.ne.s32.totalorder %s265, %s281
      %p283 = scmp.eq.s32.totalorder %s47, 0
      %p284 = por %p282, %p283
      %s285 = ssub.s32 %s49, %s56
      %s286 = ssub.s32 %s48, %s60
      %s287 = sor.u32 %s285, %s286
      %p288 = scmp.eq.s32.totalorder %s287, 0
      %s290 = sadd.s32 %s289, 1
      %s291 = scalar_select %p288, %s289, %s290
      %p294 = pneg %p288
      %p295 = scmp.eq.s32.totalorder %s41, 7
      %p296 = por %p294, %p295
      %p297 = scmp.ne.s32.totalorder %s289, %s292
      %p298 = scmp.eq.s32.totalorder %s41, 0
      %p299 = por %p297, %p298
      %p300 = scmp.ne.s32.totalorder %s289, %s292
      %p301 = scmp.eq.s32.totalorder %s46, 7
      %p302 = por %p300, %p301
      %p303 = scmp.ne.s32.totalorder %s292, %s293
      %p304 = scmp.eq.s32.totalorder %s46, 0
      %p305 = por %p303, %p304
      %p306 = scmp.ne.s32.totalorder %s292, %s293
      %p307 = scmp.eq.s32.totalorder %s47, 7
      %p308 = por %p306, %p307
      %p310 = scmp.ne.s32.totalorder %s293, %s309
      %p311 = scmp.eq.s32.totalorder %s47, 0
      %p312 = por %p310, %p311
      %s313 = ssub.s32 %s48, %s60
      %p314 = scmp.eq.s32.totalorder %s313, 0
      %s316 = sadd.s32 %s315, 1
      %s317 = scalar_select %p314, %s315, %s316
      %p320 = pneg %p314
      %p321 = scmp.eq.s32.totalorder %s41, 7
      %p322 = por %p320, %p321
      %p323 = scmp.ne.s32.totalorder %s315, %s318
      %p324 = scmp.eq.s32.totalorder %s41, 0
      %p325 = por %p323, %p324
      %p326 = scmp.ne.s32.totalorder %s315, %s318
      %p327 = scmp.eq.s32.totalorder %s46, 7
      %p328 = por %p326, %p327
      %p329 = scmp.ne.s32.totalorder %s318, %s319
      %p330 = scmp.eq.s32.totalorder %s46, 0
      %p331 = por %p329, %p330
      %p332 = scmp.ne.s32.totalorder %s318, %s319
      %p333 = scmp.eq.s32.totalorder %s47, 7
      %p334 = por %p332, %p333
      %p336 = scmp.ne.s32.totalorder %s319, %s335
      %p337 = scmp.eq.s32.totalorder %s47, 0
      %p338 = por %p336, %p337
      %s339 = ssub.s32 %s48, %s60
      %p340 = scmp.eq.s32.totalorder %s339, 0
      %s342 = sadd.s32 %s341, 1
      %s343 = scalar_select %p340, %s341, %s342
      %p346 = pneg %p340
      %p347 = scmp.eq.s32.totalorder %s41, 7
      %p348 = por %p346, %p347
      %p349 = scmp.ne.s32.totalorder %s341, %s344
      %p350 = scmp.eq.s32.totalorder %s41, 0
      %p351 = por %p349, %p350
      %p352 = scmp.ne.s32.totalorder %s341, %s344
      %p353 = scmp.eq.s32.totalorder %s46, 7
      %p354 = por %p352, %p353
      %p355 = scmp.ne.s32.totalorder %s344, %s345
      %p356 = scmp.eq.s32.totalorder %s46, 0
      %p357 = por %p355, %p356
      %p358 = scmp.ne.s32.totalorder %s344, %s345
      %p359 = scmp.eq.s32.totalorder %s47, 7
      %p360 = por %p358, %p359
      %p362 = scmp.ne.s32.totalorder %s345, %s361
      %p363 = scmp.eq.s32.totalorder %s47, 0
      %p364 = por %p362, %p363
      %s365 = ssub.s32 %s48, %s60
      %p366 = scmp.eq.s32.totalorder %s365, 0
      %s368 = sadd.s32 %s367, 1
      %s369 = scalar_select %p366, %s367, %s368
      %p372 = pneg %p366
      %p373 = scmp.eq.s32.totalorder %s41, 7
      %p374 = por %p372, %p373
      %p375 = scmp.ne.s32.totalorder %s367, %s370
      %p376 = scmp.eq.s32.totalorder %s41, 0
      %p377 = por %p375, %p376
      %p378 = scmp.ne.s32.totalorder %s367, %s370
      %p379 = scmp.eq.s32.totalorder %s46, 7
      %p380 = por %p378, %p379
      %p381 = scmp.ne.s32.totalorder %s370, %s371
      %p382 = scmp.eq.s32.totalorder %s46, 0
      %p383 = por %p381, %p382
      %p384 = scmp.ne.s32.totalorder %s370, %s371
      %p385 = scmp.eq.s32.totalorder %s47, 7
      %p386 = por %p384, %p385
      %p388 = scmp.ne.s32.totalorder %s371, %s387
      %p389 = scmp.eq.s32.totalorder %s47, 0
      %p390 = por %p388, %p389
      %s391 = ssub.s32 %s48, %s60
      %p392 = scmp.eq.s32.totalorder %s391, 0
      %s394 = sadd.s32 %s393, 1
      %s395 = scalar_select %p392, %s393, %s394
      %p398 = pneg %p392
      %p399 = scmp.eq.s32.totalorder %s41, 7
      %p400 = por %p398, %p399
      %p401 = scmp.ne.s32.totalorder %s393, %s396
      %p402 = scmp.eq.s32.totalorder %s41, 0
      %p403 = por %p401, %p402
      %p404 = scmp.ne.s32.totalorder %s393, %s396
      %p405 = scmp.eq.s32.totalorder %s46, 7
      %p406 = por %p404, %p405
      %p407 = scmp.ne.s32.totalorder %s396, %s397
      %p408 = scmp.eq.s32.totalorder %s46, 0
      %p409 = por %p407, %p408
      %p410 = scmp.ne.s32.totalorder %s396, %s397
      %p411 = scmp.eq.s32.totalorder %s47, 7
      %p412 = por %p410, %p411
      %p414 = scmp.ne.s32.totalorder %s397, %s413
      %p415 = scmp.eq.s32.totalorder %s47, 0
      %p416 = por %p414, %p415
      %s417 = ssub.s32 %s48, %s60
      %p418 = scmp.eq.s32.totalorder %s417, 0
      %s420 = sadd.s32 %s419, 1
      %s421 = scalar_select %p418, %s419, %s420
      %p424 = pneg %p418
      %p425 = scmp.eq.s32.totalorder %s41, 7
      %p426 = por %p424, %p425
      %p427 = scmp.ne.s32.totalorder %s419, %s422
      %p428 = scmp.eq.s32.totalorder %s41, 0
      %p429 = por %p427, %p428
      %p430 = scmp.ne.s32.totalorder %s419, %s422
      %p431 = scmp.eq.s32.totalorder %s46, 7
      %p432 = por %p430, %p431
      %p433 = scmp.ne.s32.totalorder %s422, %s423
      %p434 = scmp.eq.s32.totalorder %s46, 0
      %p435 = por %p433, %p434
      %p436 = scmp.ne.s32.totalorder %s422, %s423
      %p437 = scmp.eq.s32.totalorder %s47, 7
      %p438 = por %p436, %p437
      %p440 = scmp.ne.s32.totalorder %s423, %s439
      %p441 = scmp.eq.s32.totalorder %s47, 0
      %p442 = por %p440, %p441
      %s443 = ssub.s32 %s48, %s60
      %p444 = scmp.eq.s32.totalorder %s443, 0
      %s446 = sadd.s32 %s445, 1
      %s447 = scalar_select %p444, %s445, %s446
      %p450 = pneg %p444
      %p451 = scmp.eq.s32.totalorder %s41, 7
      %p452 = por %p450, %p451
      %p453 = scmp.ne.s32.totalorder %s445, %s448
      %p454 = scmp.eq.s32.totalorder %s41, 0
      %p455 = por %p453, %p454
      %p456 = scmp.ne.s32.totalorder %s445, %s448
      %p457 = scmp.eq.s32.totalorder %s46, 7
      %p458 = por %p456, %p457
      %p459 = scmp.ne.s32.totalorder %s448, %s449
      %p460 = scmp.eq.s32.totalorder %s46, 0
      %p461 = por %p459, %p460
      %p462 = scmp.ne.s32.totalorder %s448, %s449
      %p463 = scmp.eq.s32.totalorder %s47, 7
      %p464 = por %p462, %p463
      %p466 = scmp.ne.s32.totalorder %s449, %s465
      %p467 = scmp.eq.s32.totalorder %s47, 0
      %p468 = por %p466, %p467
      %s469 = ssub.s32 %s48, %s60
      %p470 = scmp.eq.s32.totalorder %s469, 0
      %s472 = sadd.s32 %s471, 1
      %s473 = scalar_select %p470, %s471, %s472
      %p476 = pneg %p470
      %p477 = scmp.eq.s32.totalorder %s41, 7
      %p478 = por %p476, %p477
      %p479 = scmp.ne.s32.totalorder %s471, %s474
      %p480 = scmp.eq.s32.totalorder %s41, 0
      %p481 = por %p479, %p480
      %p482 = scmp.ne.s32.totalorder %s471, %s474
      %p483 = scmp.eq.s32.totalorder %s46, 7
      %p484 = por %p482, %p483
      %p485 = scmp.ne.s32.totalorder %s474, %s475
      %p486 = scmp.eq.s32.totalorder %s46, 0
      %p487 = por %p485, %p486
      %p488 = scmp.ne.s32.totalorder %s474, %s475
      %p489 = scmp.eq.s32.totalorder %s47, 7
      %p490 = por %p488, %p489
      %p492 = scmp.ne.s32.totalorder %s475, %s491
      %p493 = scmp.eq.s32.totalorder %s47, 0
      %p494 = por %p492, %p493
      %s495 = ssub.s32 %s48, %s60
      %p496 = scmp.eq.s32.totalorder %s495, 0
      %s498 = sadd.s32 %s497, 1
      %s499 = scalar_select %p496, %s497, %s498
      %p502 = pneg %p496
      %p503 = scmp.eq.s32.totalorder %s41, 7
      %p504 = por %p502, %p503
      %p505 = scmp.ne.s32.totalorder %s497, %s500
      %p506 = scmp.eq.s32.totalorder %s41, 0
      %p507 = por %p505, %p506
      %p508 = scmp.ne.s32.totalorder %s497, %s500
      %p509 = scmp.eq.s32.totalorder %s46, 7
      %p510 = por %p508, %p509
      %p511 = scmp.ne.s32.totalorder %s500, %s501
      %p512 = scmp.eq.s32.totalorder %s46, 0
      %p513 = por %p511, %p512
      %p514 = scmp.ne.s32.totalorder %s500, %s501
      %p515 = scmp.eq.s32.totalorder %s47, 7
      %p516 = por %p514, %p515
      %p518 = scmp.ne.s32.totalorder %s501, %s517
      %p519 = scmp.eq.s32.totalorder %s47, 0
      %p520 = por %p518, %p519
      %s521 = ssub.s32 %s48, %s60
      %p522 = scmp.eq.s32.totalorder %s521, 0
      %s524 = sadd.s32 %s523, 1
      %s525 = scalar_select %p522, %s523, %s524
      %p528 = pneg %p522
      %p529 = scmp.eq.s32.totalorder %s41, 7
      %p530 = por %p528, %p529
      %p531 = scmp.ne.s32.totalorder %s523, %s526
      %p532 = scmp.eq.s32.totalorder %s41, 0
      %p533 = por %p531, %p532
      %p534 = scmp.ne.s32.totalorder %s523, %s526
      %p535 = scmp.eq.s32.totalorder %s46, 7
      %p536 = por %p534, %p535
      %p537 = scmp.ne.s32.totalorder %s526, %s527
      %p538 = scmp.eq.s32.totalorder %s46, 0
      %p539 = por %p537, %p538
      %p540 = scmp.ne.s32.totalorder %s526, %s527
      %p541 = scmp.eq.s32.totalorder %s47, 7
      %p542 = por %p540, %p541
      %p544 = scmp.ne.s32.totalorder %s527, %s543
      %p545 = scmp.eq.s32.totalorder %s47, 0
      %p546 = por %p544, %p545
      %p547 = scmp.le.s32.totalorder 1, %s41
      %p548 = scmp.lt.s32.totalorder %s41, 9
      %p549 = pnand %p547, %p548
      %p550 = pneg %p549
      // Predicated region
      $region9: #{tpu_custom_call.1} parent=5 // pred_check
        _
      $region10: #{tpu_custom_call.1} parent=5 // pred_check_branch
        %552 = sbr.rel (%p549) target = $region12
      $region11: #{tpu_custom_call.1} parent=5 // pred_region
        %s553 = ssub.s32 %s41, 1
        // Predicated region
        $region13: #{tpu_custom_call.1} parent=11 // pred_check
          %p554 = pneg %p102
        $region14: #{tpu_custom_call.1} parent=11 // pred_check_branch
          %556 = sbr.rel (%p554) target = $region16
        $region15: #{tpu_custom_call.1} parent=11 // pred_region
          %s558 = ssub.s32 2048, 2048
          %559 = vsyncadd [#allocation15], %s558
          %s560 = sshll.u32 [#allocation14], 4
          %s561 = int_to_ptr.vmem [resolvable:$true] %s560
          %566 = dma.hbm_to_vmem [thread:$0]  %s1, 2048, %s561, [#allocation15], 128, 128, 8
        $region16: #{tpu_custom_call.1} parent=11 // pred_fallthru
          _
        // Predicated region
        $region17: #{tpu_custom_call.1} parent=11 // pred_check
          %p567 = pneg %p123
        $region18: #{tpu_custom_call.1} parent=11 // pred_check_branch
          %569 = sbr.rel (%p567) target = $region20
        $region19: #{tpu_custom_call.1} parent=11 // pred_region
          %s571 = ssub.s32 4096, 4096
          %572 = vsyncadd [#allocation15], %s571
          %s573 = sshll.u32 [#allocation16], 4
          %s574 = int_to_ptr.vmem [resolvable:$true] %s573
          %579 = dma.hbm_to_vmem [thread:$0]  %s2, 4096, %s574, [#allocation15], 128, 128, 8
        $region20: #{tpu_custom_call.1} parent=11 // pred_fallthru
          _
        // Predicated region
        $region21: #{tpu_custom_call.1} parent=11 // pred_check
          %p580 = pneg %p144
        $region22: #{tpu_custom_call.1} parent=11 // pred_check_branch
          %582 = sbr.rel (%p580) target = $region24
        $region23: #{tpu_custom_call.1} parent=11 // pred_region
          _
        $region24: #{tpu_custom_call.1} parent=11 // pred_fallthru
          _
        // Predicated region
        $region25: #{tpu_custom_call.1} parent=11 // pred_check
          %p583 = pneg %p165
        $region26: #{tpu_custom_call.1} parent=11 // pred_check_branch
          %585 = sbr.rel (%p583) target = $region28
        $region27: #{tpu_custom_call.1} parent=11 // pred_region
          %s587 = ssub.s32 4096, 4096
          %588 = vsyncadd [#allocation18], %s587
          %s589 = sshll.u32 [#allocation17], 4
          %s590 = int_to_ptr.vmem [resolvable:$true] %s589
          %595 = dma.hbm_to_vmem [thread:$0]  %s4, 4096, %s590, [#allocation18], 128, 128, 8
        $region28: #{tpu_custom_call.1} parent=11 // pred_fallthru
          _
        // Predicated region
        $region29: #{tpu_custom_call.1} parent=11 // pred_check
          %p596 = pneg %p186
        $region30: #{tpu_custom_call.1} parent=11 // pred_check_branch
          %598 = sbr.rel (%p596) target = $region32
        $region31: #{tpu_custom_call.1} parent=11 // pred_region
          _
        $region32: #{tpu_custom_call.1} parent=11 // pred_fallthru
          _
        // Predicated region
        $region33: #{tpu_custom_call.1} parent=11 // pred_check
          %p599 = pneg %p207
        $region34: #{tpu_custom_call.1} parent=11 // pred_check_branch
          %601 = sbr.rel (%p599) target = $region36
        $region35: #{tpu_custom_call.1} parent=11 // pred_region
          _
        $region36: #{tpu_custom_call.1} parent=11 // pred_fallthru
          _
        // Predicated region
        $region37: #{tpu_custom_call.1} parent=11 // pred_check
          %p602 = pneg %p228
        $region38: #{tpu_custom_call.1} parent=11 // pred_check_branch
          %604 = sbr.rel (%p602) target = $region40
        $region39: #{tpu_custom_call.1} parent=11 // pred_region
          _
        $region40: #{tpu_custom_call.1} parent=11 // pred_fallthru
          _
        // Predicated region
        $region41: #{tpu_custom_call.1} parent=11 // pred_check
          %p605 = pneg %p249
        $region42: #{tpu_custom_call.1} parent=11 // pred_check_branch
          %607 = sbr.rel (%p605) target = $region44
        $region43: #{tpu_custom_call.1} parent=11 // pred_region
          _
        $region44: #{tpu_custom_call.1} parent=11 // pred_fallthru
          _
      $region12: #{tpu_custom_call.1} parent=5 // pred_fallthru
        _
      %p608 = scmp.lt.s32.totalorder %s41, 8
      // Predicated region
      $region45: #{tpu_custom_call.1} parent=5 // pred_check
        %p609 = pneg %p608
      $region46: #{tpu_custom_call.1} parent=5 // pred_check_branch
        %611 = sbr.rel (%p609) target = $region48
      $region47: #{tpu_custom_call.1} parent=5 // pred_region
        // Predicated region
        $region49: #{tpu_custom_call.1} parent=47 // pred_check
          %p612 = pneg %p75
        $region50: #{tpu_custom_call.1} parent=47 // pred_check_branch
          %614 = sbr.rel (%p612) target = $region52
        $region51: #{tpu_custom_call.1} parent=47 // pred_region
          %s615 = sand.u32 %s65, 1
          %s616 = scalar_lea.sflag [#allocation12], %s615
          %s617 = sand.u32 %s65, 1
          %s618 = smul.addr %s617, 8
          %s619 = scalar_lea.vmem [#allocation11], %s618
          %s621 = ssub.s32 128, 128
          %622 = vsyncadd %s616, %s621
          %s623 = sadd.s32 %s48, %s49
          %s624 = smul.addr %s623, 128
          %s625 = scalar_lea.hbm %s0, %s624
          %s627 = sshll.u32 %s619, 4
          %s628 = int_to_ptr.vmem [resolvable:$true] %s627
          %630 = dma.hbm_to_vmem [thread:$0]  %s625, 128, %s628, %s616
        $region52: #{tpu_custom_call.1} parent=47 // pred_fallthru
          _
      $region48: #{tpu_custom_call.1} parent=5 // pred_fallthru
        _
      %p631 = scmp.le.s32.totalorder 1, %s41
      %p632 = scmp.lt.s32.totalorder %s41, 9
      %p633 = pnand %p631, %p632
      %p634 = pneg %p633
      // Predicated region
      $region53: #{tpu_custom_call.1} parent=5 // pred_check
        _
      $region54: #{tpu_custom_call.1} parent=5 // pred_check_branch
        %636 = sbr.rel (%p633) target = $region56
      $region55: #{tpu_custom_call.1} parent=5 // pred_region
        %s637 = ssub.s32 %s41, 1
        %s638 = sand.u32 %s68, 1
        %s639 = scalar_lea.sflag [#allocation12], %s638
        %s640 = sand.u32 %s68, 1
        %s641 = smul.addr %s640, 8
        %s642 = scalar_lea.vmem [#allocation11], %s641
        // Predicated region
        $region57: #{tpu_custom_call.1} parent=55 // pred_check
          %p643 = pneg %p81
        $region58: #{tpu_custom_call.1} parent=55 // pred_check_branch
          %645 = sbr.rel (%p643) target = $region60
        $region59: #{tpu_custom_call.1} parent=55 // pred_region
          %646 = dma.done %s639, 128
        $region60: #{tpu_custom_call.1} parent=55 // pred_fallthru
          _
        // Predicated region
        $region61: #{tpu_custom_call.1} parent=55 // pred_check
          %p647 = pneg %p102
        $region62: #{tpu_custom_call.1} parent=55 // pred_check_branch
          %649 = sbr.rel (%p647) target = $region64
        $region63: #{tpu_custom_call.1} parent=55 // pred_region
          %650 = dma.done [#allocation15], 2048
        $region64: #{tpu_custom_call.1} parent=55 // pred_fallthru
          _
        // Predicated region
        $region65: #{tpu_custom_call.1} parent=55 // pred_check
          %p651 = pneg %p123
        $region66: #{tpu_custom_call.1} parent=55 // pred_check_branch
          %653 = sbr.rel (%p651) target = $region68
        $region67: #{tpu_custom_call.1} parent=55 // pred_region
          %654 = dma.done [#allocation15], 4096
        $region68: #{tpu_custom_call.1} parent=55 // pred_fallthru
          _
        // Predicated region
        $region69: #{tpu_custom_call.1} parent=55 // pred_check
          %p655 = pneg %p165
        $region70: #{tpu_custom_call.1} parent=55 // pred_check_branch
          %657 = sbr.rel (%p655) target = $region72
        $region71: #{tpu_custom_call.1} parent=55 // pred_region
          %658 = dma.done [#allocation18], 4096
        $region72: #{tpu_custom_call.1} parent=55 // pred_fallthru
          _
        %s659 = sand.u32 %s68, 1
        %s660 = scalar_lea.sflag [#allocation12], %s659
        %s661 = sand.u32 %s68, 1
        %s662 = smul.addr %s661, 8
        %s663 = scalar_lea.vmem [#allocation11], %s662
        %p664 = pneg %p81
        %p665 = pneg %p78
        %p666 = pneg %p102
        %p667 = pneg %p99
        %p668 = pneg %p123
        %p669 = pneg %p120
        %p670 = pneg %p144
        %p671 = pneg %p141
        %p672 = pneg %p165
        %p673 = pneg %p162
        %p674 = pneg %p186
        %p675 = pneg %p183
        %p676 = pneg %p207
        %p677 = pneg %p204
        %p678 = pneg %p228
        %p679 = pneg %p225
        %p680 = pneg %p249
        %p681 = pneg %p246
        %p682 = pneg %p277
        %p683 = pneg %p274
        %s684 = sand.u32 %s264, 1
        %s685 = scalar_lea.sflag [#allocation13], %s684
        %s686 = sand.u32 %s264, 1
        %s687 = smul.addr %s686, 8
        %s688 = scalar_lea.vmem [#allocation19], %s687
        %p689 = pneg %p305
        %p690 = pneg %p302
        %s691 = sand.u32 %s46, 1
        %s692 = scalar_lea.sflag [#allocation21], %s691
        %s693 = sand.u32 %s292, 1
        %s694 = smul.addr %s693, 8
        %s695 = scalar_lea.vmem [#allocation20], %s694
        %p696 = pneg %p331
        %p697 = pneg %p328
        %p698 = pneg %p357
        %p699 = pneg %p354
        %p700 = pneg %p383
        %p701 = pneg %p380
        %p702 = pneg %p409
        %p703 = pneg %p406
        %p704 = pneg %p435
        %p705 = pneg %p432
        %p706 = pneg %p461
        %p707 = pneg %p458
        %p708 = pneg %p487
        %p709 = pneg %p484
        %p710 = pneg %p513
        %p711 = pneg %p510
        %p712 = pneg %p539
        %p713 = pneg %p536
        %p714 = scmp.eq.s32.totalorder %s51, 0
        // Predicated region
        $region73: #{tpu_custom_call.1} parent=55 // pred_check
          %p715 = pneg %p714
        $region74: #{tpu_custom_call.1} parent=55 // pred_check_branch
          %717 = sbr.rel (%p715) target = $region76
        $region75: #{tpu_custom_call.1} parent=55 // pred_region
          %718 = vst [vmem:[#allocation2] sm:$0xff] 0.0
          %719 = vst [vmem:[#allocation3] sm:$0xff] 0.0
          %720 = vst [vmem:[#allocation4] sm:$0xff] 0.01
          %721 = vst [vmem:[#allocation5] sm:$0xff] 0.0
          %722 = vst [vmem:[#allocation6] sm:$0xff] 0.0
          %723 = vst [vmem:[#allocation7] sm:$0xff] 0.01
          %724 = vst [vmem:[#allocation8] sm:$0xff] 0.0
          %725 = vst [vmem:[#allocation9] sm:$0xff] 0.0
          %726 = vst [vmem:[#allocation10] sm:$0xff] 0.01
        $region76: #{tpu_custom_call.1} parent=55 // pred_fallthru
          _
        %v727 = vld [vmem:[%s642] sm:$0xff]
        %v728 = vld [vmem:[#allocation3] sm:$0xff]
        %v729 = vld [vmem:[#allocation14] sm:$0xff]
        %v730 = vld [vmem:[#allocation14 + $0x8] sm:$0xff]
        %v731 = vld [vmem:[#allocation14 + $0x10] sm:$0xff]
        %v732 = vld [vmem:[#allocation14 + $0x18] sm:$0xff]
        %v733 = vld [vmem:[#allocation14 + $0x20] sm:$0xff]
        %v734 = vld [vmem:[#allocation14 + $0x28] sm:$0xff]
        %v735 = vld [vmem:[#allocation14 + $0x30] sm:$0xff]
        %v736 = vld [vmem:[#allocation14 + $0x38] sm:$0xff]
        %v737 = vld [vmem:[#allocation14 + $0x40] sm:$0xff]
        %v738 = vld [vmem:[#allocation14 + $0x48] sm:$0xff]
        %v739 = vld [vmem:[#allocation14 + $0x50] sm:$0xff]
        %v740 = vld [vmem:[#allocation14 + $0x58] sm:$0xff]
        %v741 = vld [vmem:[#allocation14 + $0x60] sm:$0xff]
        %v742 = vld [vmem:[#allocation14 + $0x68] sm:$0xff]
        %v743 = vld [vmem:[#allocation14 + $0x70] sm:$0xff]
        %v744 = vld [vmem:[#allocation14 + $0x78] sm:$0xff]
        %745 = vmatprep.subr.mxu0 0.0
        %746 = vmatpush1.msra.mxu0 %v744
        %747 = vmatprep.subr.mxu0 0.0
        %748 = vmatpush1.msra.mxu0 %v743
        %749 = vmatprep.subr.mxu0 0.0
        %750 = vmatpush1.msra.mxu0 %v742
        %751 = vmatprep.subr.mxu0 0.0
        %752 = vmatpush1.msra.mxu0 %v741
        %753 = vmatprep.subr.mxu0 0.0
        %754 = vmatpush1.msra.mxu0 %v740
        %755 = vmatprep.subr.mxu0 0.0
        %756 = vmatpush1.msra.mxu0 %v739
        %757 = vmatprep.subr.mxu0 0.0
        %758 = vmatpush1.msra.mxu0 %v738
        %759 = vmatprep.subr.mxu0 0.0
        %760 = vmatpush1.msra.mxu0 %v737
        %761 = vmatprep.subr.mxu0 0.0
        %762 = vmatpush1.msra.mxu0 %v736
        %763 = vmatprep.subr.mxu0 0.0
        %764 = vmatpush1.msra.mxu0 %v735
        %765 = vmatprep.subr.mxu0 0.0
        %766 = vmatpush1.msra.mxu0 %v734
        %767 = vmatprep.subr.mxu0 0.0
        %768 = vmatpush1.msra.mxu0 %v733
        %769 = vmatprep.subr.mxu0 0.0
        %770 = vmatpush1.msra.mxu0 %v732
        %771 = vmatprep.subr.mxu0 0.0
        %772 = vmatpush1.msra.mxu0 %v731
        %773 = vmatprep.subr.mxu0 0.0
        %774 = vmatpush1.msra.mxu0 %v730
        %775 = vmatprep.subr.mxu0 0.0
        %776 = vmatpush1.msra.mxu0 %v729
        %777 = vmatprep.subr.mxu0 0.0
        %778 = vmatpush2.msra.mxu0 0.0
        %779 = vmatprep.subr.mxu0 0.0
        %780 = vmatpush2.msra.mxu0 0.0
        %781 = vmatprep.subr.mxu0 0.0
        %782 = vmatpush2.msra.mxu0 0.0
        %783 = vmatprep.subr.mxu0 0.0
        %784 = vmatpush2.msra.mxu0 0.0
        %785 = vmatprep.subr.mxu0 0.0
        %786 = vmatpush2.msra.mxu0 0.0
        %787 = vmatprep.subr.mxu0 0.0
        %788 = vmatpush2.msra.mxu0 0.0
        %789 = vmatprep.subr.mxu0 0.0
        %790 = vmatpush2.msra.mxu0 0.0
        %791 = vmatprep.subr.mxu0 0.0
        %792 = vmatpush2.msra.mxu0 0.0
        %793 = vmatprep.subr.mxu0 0.0
        %794 = vmatpush2.msra.mxu0 0.0
        %795 = vmatprep.subr.mxu0 0.0
        %796 = vmatpush2.msra.mxu0 0.0
        %797 = vmatprep.subr.mxu0 0.0
        %798 = vmatpush2.msra.mxu0 0.0
        %799 = vmatprep.subr.mxu0 0.0
        %800 = vmatpush2.msra.mxu0 0.0
        %801 = vmatprep.subr.mxu0 0.0
        %802 = vmatpush2.msra.mxu0 0.0
        %803 = vmatprep.subr.mxu0 0.0
        %804 = vmatpush2.msra.mxu0 0.0
        %805 = vmatprep.subr.mxu0 0.0
        %806 = vmatpush2.msra.mxu0 0.0
        %807 = vmatprep.subr.mxu0 0.0
        %808 = vmatpush2.msra.mxu0 0.0
        %809 = vmatprep.mubr.f32.mxu0 0.0
        %810 = vmatmul.mubr.f32.gmra.mxu0 %v728
        %v811 = vpop.f32.mrf.mxu0
        %v812 = vadd.f32 0.0, %v811
        %v813 = vpop.f32.mrf.mxu0
        %814 = vdwg.mxu0
        %v815 = vadd.f32 %v727, %v812
        %v816 = vld [vmem:[%s6] sm:$0x1]
        %v817 = vld [vmem:[#allocation4] sm:$0xff]
        %v819 = vlaneseq
        %v820 = vshrl.u32 %v819, 7
        %v821 = vsub.s32 0, %v820
        %v822 = vrot.slane %v816, %v821
        %v824 = vmul.f32 %v822, %v817
        %v825 = vsub.f32 1.0, %v816
        %v827 = vlaneseq
        %v828 = vshrl.u32 %v827, 7
        %v829 = vsub.s32 0, %v828
        %v830 = vrot.slane %v825, %v829
        %v832 = vmul.f32 %v830, %v728
        %v833 = vadd.f32 %v824, %v832
        %v834 = vmul.f32 %v833, 1.8
        %v835 = vadd.f32 %v834, 0.01
        %v836 = vld [vmem:[#allocation2] sm:$0xff]
        %v837 = vmul.f32 %v836, 0.95122945
        %v838 = vmul.f32 %v815, 0.048770577
        %v839 = vadd.f32 %v837, %v838
        %v840 = vmul.f32 %v835, %v728
        %v841 = vsub.f32 %v839, %v840
        %v842 = vsub.f32 %v841, %v835
        %vm843 = vcmp.gt.f32.partialorder %v842, 0.0
        %v844 = vsel %vm843, 1, 0
        %v845 = vcvt.s32.f32 %v844
        %846 = vst [vmem:[#allocation2] sm:$0xff] %v841
        %847 = vst [vmem:[#allocation3] sm:$0xff] %v845
        %848 = vst [vmem:[#allocation4] sm:$0xff] %v833
        %v849 = vld [vmem:[#allocation6] sm:$0xff]
        %v850 = vld [vmem:[#allocation16] sm:$0xff]
        %v851 = vld [vmem:[#allocation16 + $0x8] sm:$0xff]
        %v852 = vld [vmem:[#allocation16 + $0x10] sm:$0xff]
        %v853 = vld [vmem:[#allocation16 + $0x18] sm:$0xff]
        %v854 = vld [vmem:[#allocation16 + $0x20] sm:$0xff]
        %v855 = vld [vmem:[#allocation16 + $0x28] sm:$0xff]
        %v856 = vld [vmem:[#allocation16 + $0x30] sm:$0xff]
        %v857 = vld [vmem:[#allocation16 + $0x38] sm:$0xff]
        %v858 = vld [vmem:[#allocation16 + $0x40] sm:$0xff]
        %v859 = vld [vmem:[#allocation16 + $0x48] sm:$0xff]
        %v860 = vld [vmem:[#allocation16 + $0x50] sm:$0xff]
        %v861 = vld [vmem:[#allocation16 + $0x58] sm:$0xff]
        %v862 = vld [vmem:[#allocation16 + $0x60] sm:$0xff]
        %v863 = vld [vmem:[#allocation16 + $0x68] sm:$0xff]
        %v864 = vld [vmem:[#allocation16 + $0x70] sm:$0xff]
        %v865 = vld [vmem:[#allocation16 + $0x78] sm:$0xff]
        %v866 = vld [vmem:[#allocation16 + $0x80] sm:$0xff]
        %v867 = vld [vmem:[#allocation16 + $0x88] sm:$0xff]
        %v868 = vld [vmem:[#allocation16 + $0x90] sm:$0xff]
        %v869 = vld [vmem:[#allocation16 + $0x98] sm:$0xff]
        %v870 = vld [vmem:[#allocation16 + $0xa0] sm:$0xff]
        %v871 = vld [vmem:[#allocation16 + $0xa8] sm:$0xff]
        %v872 = vld [vmem:[#allocation16 + $0xb0] sm:$0xff]
        %v873 = vld [vmem:[#allocation16 + $0xb8] sm:$0xff]
        %v874 = vld [vmem:[#allocation16 + $0xc0] sm:$0xff]
        %v875 = vld [vmem:[#allocation16 + $0xc8] sm:$0xff]
        %v876 = vld [vmem:[#allocation16 + $0xd0] sm:$0xff]
        %v877 = vld [vmem:[#allocation16 + $0xd8] sm:$0xff]
        %v878 = vld [vmem:[#allocation16 + $0xe0] sm:$0xff]
        %v879 = vld [vmem:[#allocation16 + $0xe8] sm:$0xff]
        %v880 = vld [vmem:[#allocation16 + $0xf0] sm:$0xff]
        %v881 = vld [vmem:[#allocation16 + $0xf8] sm:$0xff]
        %v882 = vld [vmem:[%s3] sm:$0x1]
        %v884 = vlaneseq
        %v885 = vshrl.u32 %v884, 7
        %v886 = vsub.s32 0, %v885
        %v887 = vrot.slane %v882, %v886
        %889 = vmatprep.subr.mxu0 0.0
        %890 = vmatpush1.msra.mxu0 %v865
        %891 = vmatprep.subr.mxu0 0.0
        %892 = vmatpush1.msra.mxu0 %v864
        %893 = vmatprep.subr.mxu0 0.0
        %894 = vmatpush1.msra.mxu0 %v863
        %895 = vmatprep.subr.mxu0 0.0
        %896 = vmatpush1.msra.mxu0 %v862
        %897 = vmatprep.subr.mxu0 0.0
        %898 = vmatpush1.msra.mxu0 %v861
        %899 = vmatprep.subr.mxu0 0.0
        %900 = vmatpush1.msra.mxu0 %v860
        %901 = vmatprep.subr.mxu0 0.0
        %902 = vmatpush1.msra.mxu0 %v859
        %903 = vmatprep.subr.mxu0 0.0
        %904 = vmatpush1.msra.mxu0 %v858
        %905 = vmatprep.subr.mxu0 0.0
        %906 = vmatpush1.msra.mxu0 %v857
        %907 = vmatprep.subr.mxu0 0.0
        %908 = vmatpush1.msra.mxu0 %v856
        %909 = vmatprep.subr.mxu0 0.0
        %910 = vmatpush1.msra.mxu0 %v855
        %911 = vmatprep.subr.mxu0 0.0
        %912 = vmatpush1.msra.mxu0 %v854
        %913 = vmatprep.subr.mxu0 0.0
        %914 = vmatpush1.msra.mxu0 %v853
        %915 = vmatprep.subr.mxu0 0.0
        %916 = vmatpush1.msra.mxu0 %v852
        %917 = vmatprep.subr.mxu0 0.0
        %918 = vmatpush1.msra.mxu0 %v851
        %919 = vmatprep.subr.mxu0 0.0
        %920 = vmatpush1.msra.mxu0 %v850
        %921 = vmatprep.subr.mxu0 0.0
        %922 = vmatpush2.msra.mxu0 %v881
        %923 = vmatprep.subr.mxu0 0.0
        %924 = vmatpush2.msra.mxu0 %v880
        %925 = vmatprep.subr.mxu0 0.0
        %926 = vmatpush2.msra.mxu0 %v879
        %927 = vmatprep.subr.mxu0 0.0
        %928 = vmatpush2.msra.mxu0 %v878
        %929 = vmatprep.subr.mxu0 0.0
        %930 = vmatpush2.msra.mxu0 %v877
        %931 = vmatprep.subr.mxu0 0.0
        %932 = vmatpush2.msra.mxu0 %v876
        %933 = vmatprep.subr.mxu0 0.0
        %934 = vmatpush2.msra.mxu0 %v875
        %935 = vmatprep.subr.mxu0 0.0
        %936 = vmatpush2.msra.mxu0 %v874
        %937 = vmatprep.subr.mxu0 0.0
        %938 = vmatpush2.msra.mxu0 %v873
        %939 = vmatprep.subr.mxu0 0.0
        %940 = vmatpush2.msra.mxu0 %v872
        %941 = vmatprep.subr.mxu0 0.0
        %942 = vmatpush2.msra.mxu0 %v871
        %943 = vmatprep.subr.mxu0 0.0
        %944 = vmatpush2.msra.mxu0 %v870
        %945 = vmatprep.subr.mxu0 0.0
        %946 = vmatpush2.msra.mxu0 %v869
        %947 = vmatprep.subr.mxu0 0.0
        %948 = vmatpush2.msra.mxu0 %v868
        %949 = vmatprep.subr.mxu0 0.0
        %950 = vmatpush2.msra.mxu0 %v867
        %951 = vmatprep.subr.mxu0 0.0
        %952 = vmatpush2.msra.mxu0 %v866
        %953 = vmatprep.mubr.f32.mxu0 %v849
        %954 = vmatmul.mubr.f32.gmra.mxu0 %v845
        %v955 = vpop.f32.mrf.mxu0
        %v956 = vadd.f32 %v887, %v955
        %v957 = vpop.f32.mrf.mxu0
        %958 = vdwg.mxu0
        %v959 = vld [vmem:[%s7] sm:$0x1]
        %v960 = vld [vmem:[#allocation7] sm:$0xff]
        %v962 = vlaneseq
        %v963 = vshrl.u32 %v962, 7
        %v964 = vsub.s32 0, %v963
        %v965 = vrot.slane %v959, %v964
        %v967 = vmul.f32 %v965, %v960
        %v968 = vsub.f32 1.0, %v959
        %v970 = vlaneseq
        %v971 = vshrl.u32 %v970, 7
        %v972 = vsub.s32 0, %v971
        %v973 = vrot.slane %v968, %v972
        %v975 = vmul.f32 %v973, %v849
        %v976 = vadd.f32 %v967, %v975
        %v977 = vmul.f32 %v976, 1.8
        %v978 = vadd.f32 %v977, 0.01
        %v979 = vld [vmem:[#allocation5] sm:$0xff]
        %v980 = vmul.f32 %v979, 0.95122945
        %v981 = vmul.f32 %v956, 0.048770577
        %v982 = vadd.f32 %v980, %v981
        %v983 = vmul.f32 %v978, %v849
        %v984 = vsub.f32 %v982, %v983
        %v985 = vsub.f32 %v984, %v978
        %vm986 = vcmp.gt.f32.partialorder %v985, 0.0
        %v987 = vsel %vm986, 1, 0
        %v988 = vcvt.s32.f32 %v987
        %989 = vst [vmem:[#allocation5] sm:$0xff] %v984
        %990 = vst [vmem:[#allocation6] sm:$0xff] %v988
        %991 = vst [vmem:[#allocation7] sm:$0xff] %v976
        %v992 = vld [vmem:[#allocation9] sm:$0xff]
        %v993 = vld [vmem:[#allocation17] sm:$0xff]
        %v994 = vld [vmem:[#allocation17 + $0x8] sm:$0xff]
        %v995 = vld [vmem:[#allocation17 + $0x10] sm:$0xff]
        %v996 = vld [vmem:[#allocation17 + $0x18] sm:$0xff]
        %v997 = vld [vmem:[#allocation17 + $0x20] sm:$0xff]
        %v998 = vld [vmem:[#allocation17 + $0x28] sm:$0xff]
        %v999 = vld [vmem:[#allocation17 + $0x30] sm:$0xff]
        %v1000 = vld [vmem:[#allocation17 + $0x38] sm:$0xff]
        %v1001 = vld [vmem:[#allocation17 + $0x40] sm:$0xff]
        %v1002 = vld [vmem:[#allocation17 + $0x48] sm:$0xff]
        %v1003 = vld [vmem:[#allocation17 + $0x50] sm:$0xff]
        %v1004 = vld [vmem:[#allocation17 + $0x58] sm:$0xff]
        %v1005 = vld [vmem:[#allocation17 + $0x60] sm:$0xff]
        %v1006 = vld [vmem:[#allocation17 + $0x68] sm:$0xff]
        %v1007 = vld [vmem:[#allocation17 + $0x70] sm:$0xff]
        %v1008 = vld [vmem:[#allocation17 + $0x78] sm:$0xff]
        %v1009 = vld [vmem:[#allocation17 + $0x80] sm:$0xff]
        %v1010 = vld [vmem:[#allocation17 + $0x88] sm:$0xff]
        %v1011 = vld [vmem:[#allocation17 + $0x90] sm:$0xff]
        %v1012 = vld [vmem:[#allocation17 + $0x98] sm:$0xff]
        %v1013 = vld [vmem:[#allocation17 + $0xa0] sm:$0xff]
        %v1014 = vld [vmem:[#allocation17 + $0xa8] sm:$0xff]
        %v1015 = vld [vmem:[#allocation17 + $0xb0] sm:$0xff]
        %v1016 = vld [vmem:[#allocation17 + $0xb8] sm:$0xff]
        %v1017 = vld [vmem:[#allocation17 + $0xc0] sm:$0xff]
        %v1018 = vld [vmem:[#allocation17 + $0xc8] sm:$0xff]
        %v1019 = vld [vmem:[#allocation17 + $0xd0] sm:$0xff]
        %v1020 = vld [vmem:[#allocation17 + $0xd8] sm:$0xff]
        %v1021 = vld [vmem:[#allocation17 + $0xe0] sm:$0xff]
        %v1022 = vld [vmem:[#allocation17 + $0xe8] sm:$0xff]
        %v1023 = vld [vmem:[#allocation17 + $0xf0] sm:$0xff]
        %v1024 = vld [vmem:[#allocation17 + $0xf8] sm:$0xff]
        %v1025 = vld [vmem:[%s5] sm:$0x1]
        %v1027 = vlaneseq
        %v1028 = vshrl.u32 %v1027, 7
        %v1029 = vsub.s32 0, %v1028
        %v1030 = vrot.slane %v1025, %v1029
        %1032 = vmatprep.subr.mxu0 0.0
        %1033 = vmatpush1.msra.mxu0 %v1008
        %1034 = vmatprep.subr.mxu0 0.0
        %1035 = vmatpush1.msra.mxu0 %v1007
        %1036 = vmatprep.subr.mxu0 0.0
        %1037 = vmatpush1.msra.mxu0 %v1006
        %1038 = vmatprep.subr.mxu0 0.0
        %1039 = vmatpush1.msra.mxu0 %v1005
        %1040 = vmatprep.subr.mxu0 0.0
        %1041 = vmatpush1.msra.mxu0 %v1004
        %1042 = vmatprep.subr.mxu0 0.0
        %1043 = vmatpush1.msra.mxu0 %v1003
        %1044 = vmatprep.subr.mxu0 0.0
        %1045 = vmatpush1.msra.mxu0 %v1002
        %1046 = vmatprep.subr.mxu0 0.0
        %1047 = vmatpush1.msra.mxu0 %v1001
        %1048 = vmatprep.subr.mxu0 0.0
        %1049 = vmatpush1.msra.mxu0 %v1000
        %1050 = vmatprep.subr.mxu0 0.0
        %1051 = vmatpush1.msra.mxu0 %v999
        %1052 = vmatprep.subr.mxu0 0.0
        %1053 = vmatpush1.msra.mxu0 %v998
        %1054 = vmatprep.subr.mxu0 0.0
        %1055 = vmatpush1.msra.mxu0 %v997
        %1056 = vmatprep.subr.mxu0 0.0
        %1057 = vmatpush1.msra.mxu0 %v996
        %1058 = vmatprep.subr.mxu0 0.0
        %1059 = vmatpush1.msra.mxu0 %v995
        %1060 = vmatprep.subr.mxu0 0.0
        %1061 = vmatpush1.msra.mxu0 %v994
        %1062 = vmatprep.subr.mxu0 0.0
        %1063 = vmatpush1.msra.mxu0 %v993
        %1064 = vmatprep.subr.mxu0 0.0
        %1065 = vmatpush2.msra.mxu0 %v1024
        %1066 = vmatprep.subr.mxu0 0.0
        %1067 = vmatpush2.msra.mxu0 %v1023
        %1068 = vmatprep.subr.mxu0 0.0
        %1069 = vmatpush2.msra.mxu0 %v1022
        %1070 = vmatprep.subr.mxu0 0.0
        %1071 = vmatpush2.msra.mxu0 %v1021
        %1072 = vmatprep.subr.mxu0 0.0
        %1073 = vmatpush2.msra.mxu0 %v1020
        %1074 = vmatprep.subr.mxu0 0.0
        %1075 = vmatpush2.msra.mxu0 %v1019
        %1076 = vmatprep.subr.mxu0 0.0
        %1077 = vmatpush2.msra.mxu0 %v1018
        %1078 = vmatprep.subr.mxu0 0.0
        %1079 = vmatpush2.msra.mxu0 %v1017
        %1080 = vmatprep.subr.mxu0 0.0
        %1081 = vmatpush2.msra.mxu0 %v1016
        %1082 = vmatprep.subr.mxu0 0.0
        %1083 = vmatpush2.msra.mxu0 %v1015
        %1084 = vmatprep.subr.mxu0 0.0
        %1085 = vmatpush2.msra.mxu0 %v1014
        %1086 = vmatprep.subr.mxu0 0.0
        %1087 = vmatpush2.msra.mxu0 %v1013
        %1088 = vmatprep.subr.mxu0 0.0
        %1089 = vmatpush2.msra.mxu0 %v1012
        %1090 = vmatprep.subr.mxu0 0.0
        %1091 = vmatpush2.msra.mxu0 %v1011
        %1092 = vmatprep.subr.mxu0 0.0
        %1093 = vmatpush2.msra.mxu0 %v1010
        %1094 = vmatprep.subr.mxu0 0.0
        %1095 = vmatpush2.msra.mxu0 %v1009
        %1096 = vmatprep.mubr.f32.mxu0 %v992
        %1097 = vmatmul.mubr.f32.gmra.mxu0 %v988
        %v1098 = vpop.f32.mrf.mxu0
        %v1099 = vadd.f32 %v1030, %v1098
        %v1100 = vpop.f32.mrf.mxu0
        %1101 = vdwg.mxu0
        %v1102 = vld [vmem:[%s8] sm:$0x1]
        %v1103 = vld [vmem:[#allocation10] sm:$0xff]
        %v1105 = vlaneseq
        %v1106 = vshrl.u32 %v1105, 7
        %v1107 = vsub.s32 0, %v1106
        %v1108 = vrot.slane %v1102, %v1107
        %v1110 = vmul.f32 %v1108, %v1103
        %v1111 = vsub.f32 1.0, %v1102
        %v1113 = vlaneseq
        %v1114 = vshrl.u32 %v1113, 7
        %v1115 = vsub.s32 0, %v1114
        %v1116 = vrot.slane %v1111, %v1115
        %v1118 = vmul.f32 %v1116, %v992
        %v1119 = vadd.f32 %v1110, %v1118
        %v1120 = vmul.f32 %v1119, 1.8
        %v1121 = vadd.f32 %v1120, 0.01
        %v1122 = vld [vmem:[#allocation8] sm:$0xff]
        %v1123 = vmul.f32 %v1122, 0.95122945
        %v1124 = vmul.f32 %v1099, 0.048770577
        %v1125 = vadd.f32 %v1123, %v1124
        %v1126 = vmul.f32 %v1121, %v992
        %v1127 = vsub.f32 %v1125, %v1126
        %v1128 = vsub.f32 %v1127, %v1121
        %vm1129 = vcmp.gt.f32.partialorder %v1128, 0.0
        %v1130 = vsel %vm1129, 1, 0
        %v1131 = vcvt.s32.f32 %v1130
        %1132 = vst [vmem:[#allocation8] sm:$0xff] %v1127
        %1133 = vst [vmem:[#allocation9] sm:$0xff] %v1131
        %1134 = vst [vmem:[#allocation10] sm:$0xff] %v1119
        %1135 = vst [vmem:[%s688] sm:$0xff] %v1127
        %1136 = vst [vmem:[%s695] sm:$0xff] %v1131
        %p1137 = scmp.eq.s32.totalorder %s51, 7
        // Predicated region
        $region77: #{tpu_custom_call.1} parent=55 // pred_check
          %p1138 = pneg %p1137
        $region78: #{tpu_custom_call.1} parent=55 // pred_check_branch
          %1140 = sbr.rel (%p1138) target = $region80
        $region79: #{tpu_custom_call.1} parent=55 // pred_region
          %v1141 = vld [vmem:[#allocation2] sm:$0xff]
          %1142 = vst [vmem:[#allocation22] sm:$0xff] %v1141
          %v1143 = vld [vmem:[#allocation5] sm:$0xff]
          %1144 = vst [vmem:[#allocation23] sm:$0xff] %v1143
          %v1145 = vld [vmem:[#allocation8] sm:$0xff]
          %1146 = vst [vmem:[#allocation25] sm:$0xff] %v1145
          %v1147 = vld [vmem:[#allocation3] sm:$0xff]
          %1148 = vst [vmem:[#allocation26] sm:$0xff] %v1147
          %v1149 = vld [vmem:[#allocation6] sm:$0xff]
          %1150 = vst [vmem:[#allocation28] sm:$0xff] %v1149
          %v1151 = vld [vmem:[#allocation9] sm:$0xff]
          %1152 = vst [vmem:[#allocation29] sm:$0xff] %v1151
          %v1153 = vld [vmem:[#allocation4] sm:$0xff]
          %1154 = vst [vmem:[#allocation31] sm:$0xff] %v1153
          %v1155 = vld [vmem:[#allocation7] sm:$0xff]
          %1156 = vst [vmem:[#allocation32] sm:$0xff] %v1155
          %v1157 = vld [vmem:[#allocation10] sm:$0xff]
          %1158 = vst [vmem:[#allocation34] sm:$0xff] %v1157
        $region80: #{tpu_custom_call.1} parent=55 // pred_fallthru
          _
        %s1159 = sand.u32 %s264, 1
        %s1160 = scalar_lea.sflag [#allocation13], %s1159
        %s1161 = sand.u32 %s264, 1
        %s1162 = smul.addr %s1161, 8
        %s1163 = scalar_lea.vmem [#allocation19], %s1162
        %s1164 = sand.u32 %s46, 1
        %s1165 = scalar_lea.sflag [#allocation21], %s1164
        %s1166 = sand.u32 %s292, 1
        %s1167 = smul.addr %s1166, 8
        %s1168 = scalar_lea.vmem [#allocation20], %s1167
        // Predicated region
        $region81: #{tpu_custom_call.1} parent=55 // pred_check
          %p1169 = pneg %p274
        $region82: #{tpu_custom_call.1} parent=55 // pred_check_branch
          %1171 = sbr.rel (%p1169) target = $region84
        $region83: #{tpu_custom_call.1} parent=55 // pred_region
          %s1173 = ssub.s32 128, 128
          %1174 = vsyncadd %s1160, %s1173
          %s1175 = sadd.s32 %s50, %s51
          %s1176 = smul.addr %s1175, 128
          %s1177 = scalar_lea.hbm %s9, %s1176
          %s1179 = sshll.u32 %s1163, 4
          %s1180 = int_to_ptr.vmem [resolvable:$true] %s1179
          %1182 = dma.vmem_to_hbm [thread:$0]  %s1180, 128, %s1177, %s1160
        $region84: #{tpu_custom_call.1} parent=55 // pred_fallthru
          _
        // Predicated region
        $region85: #{tpu_custom_call.1} parent=55 // pred_check
          %p1183 = pneg %p302
        $region86: #{tpu_custom_call.1} parent=55 // pred_check_branch
          %1185 = sbr.rel (%p1183) target = $region88
        $region87: #{tpu_custom_call.1} parent=55 // pred_region
          %s1187 = ssub.s32 128, 128
          %1188 = vsyncadd %s1165, %s1187
          %s1189 = sadd.s32 %s50, %s51
          %s1190 = smul.addr %s1189, 128
          %s1191 = scalar_lea.hbm %s10, %s1190
          %s1193 = sshll.u32 %s1168, 4
          %s1194 = int_to_ptr.vmem [resolvable:$true] %s1193
          %1196 = dma.vmem_to_hbm [thread:$0]  %s1194, 128, %s1191, %s1165
        $region88: #{tpu_custom_call.1} parent=55 // pred_fallthru
          _
        // Predicated region
        $region89: #{tpu_custom_call.1} parent=55 // pred_check
          %p1197 = pneg %p328
        $region90: #{tpu_custom_call.1} parent=55 // pred_check_branch
          %1199 = sbr.rel (%p1197) target = $region92
        $region91: #{tpu_custom_call.1} parent=55 // pred_region
          %s1201 = ssub.s32 128, 128
          %1202 = vsyncadd [#allocation21], %s1201
          %s1203 = smul.addr %s50, 128
          %s1204 = scalar_lea.hbm %s11, %s1203
          %s1206 = sshll.u32 [#allocation22], 4
          %s1207 = int_to_ptr.vmem [resolvable:$true] %s1206
          %1209 = dma.vmem_to_hbm [thread:$0]  %s1207, 128, %s1204, [#allocation21]
        $region92: #{tpu_custom_call.1} parent=55 // pred_fallthru
          _
        // Predicated region
        $region93: #{tpu_custom_call.1} parent=55 // pred_check
          %p1210 = pneg %p354
        $region94: #{tpu_custom_call.1} parent=55 // pred_check_branch
          %1212 = sbr.rel (%p1210) target = $region96
        $region95: #{tpu_custom_call.1} parent=55 // pred_region
          %s1214 = ssub.s32 128, 128
          %1215 = vsyncadd [#allocation24], %s1214
          %s1216 = smul.addr %s50, 128
          %s1217 = scalar_lea.hbm %s12, %s1216
          %s1219 = sshll.u32 [#allocation23], 4
          %s1220 = int_to_ptr.vmem [resolvable:$true] %s1219
          %1222 = dma.vmem_to_hbm [thread:$0]  %s1220, 128, %s1217, [#allocation24]
        $region96: #{tpu_custom_call.1} parent=55 // pred_fallthru
          _
        // Predicated region
        $region97: #{tpu_custom_call.1} parent=55 // pred_check
          %p1223 = pneg %p380
        $region98: #{tpu_custom_call.1} parent=55 // pred_check_branch
          %1225 = sbr.rel (%p1223) target = $region100
        $region99: #{tpu_custom_call.1} parent=55 // pred_region
          %s1227 = ssub.s32 128, 128
          %1228 = vsyncadd [#allocation24], %s1227
          %s1229 = smul.addr %s50, 128
          %s1230 = scalar_lea.hbm %s13, %s1229
          %s1232 = sshll.u32 [#allocation25], 4
          %s1233 = int_to_ptr.vmem [resolvable:$true] %s1232
          %1235 = dma.vmem_to_hbm [thread:$0]  %s1233, 128, %s1230, [#allocation24]
        $region100: #{tpu_custom_call.1} parent=55 // pred_fallthru
          _
        // Predicated region
        $region101: #{tpu_custom_call.1} parent=55 // pred_check
          %p1236 = pneg %p406
        $region102: #{tpu_custom_call.1} parent=55 // pred_check_branch
          %1238 = sbr.rel (%p1236) target = $region104
        $region103: #{tpu_custom_call.1} parent=55 // pred_region
          %s1240 = ssub.s32 128, 128
          %1241 = vsyncadd [#allocation27], %s1240
          %s1242 = smul.addr %s50, 128
          %s1243 = scalar_lea.hbm %s14, %s1242
          %s1245 = sshll.u32 [#allocation26], 4
          %s1246 = int_to_ptr.vmem [resolvable:$true] %s1245
          %1248 = dma.vmem_to_hbm [thread:$0]  %s1246, 128, %s1243, [#allocation27]
        $region104: #{tpu_custom_call.1} parent=55 // pred_fallthru
          _
        // Predicated region
        $region105: #{tpu_custom_call.1} parent=55 // pred_check
          %p1249 = pneg %p432
        $region106: #{tpu_custom_call.1} parent=55 // pred_check_branch
          %1251 = sbr.rel (%p1249) target = $region108
        $region107: #{tpu_custom_call.1} parent=55 // pred_region
          %s1253 = ssub.s32 128, 128
          %1254 = vsyncadd [#allocation27], %s1253
          %s1255 = smul.addr %s50, 128
          %s1256 = scalar_lea.hbm %s15, %s1255
          %s1258 = sshll.u32 [#allocation28], 4
          %s1259 = int_to_ptr.vmem [resolvable:$true] %s1258
          %1261 = dma.vmem_to_hbm [thread:$0]  %s1259, 128, %s1256, [#allocation27]
        $region108: #{tpu_custom_call.1} parent=55 // pred_fallthru
          _
        // Predicated region
        $region109: #{tpu_custom_call.1} parent=55 // pred_check
          %p1262 = pneg %p458
        $region110: #{tpu_custom_call.1} parent=55 // pred_check_branch
          %1264 = sbr.rel (%p1262) target = $region112
        $region111: #{tpu_custom_call.1} parent=55 // pred_region
          %s1266 = ssub.s32 128, 128
          %1267 = vsyncadd [#allocation30], %s1266
          %s1268 = smul.addr %s50, 128
          %s1269 = scalar_lea.hbm %s16, %s1268
          %s1271 = sshll.u32 [#allocation29], 4
          %s1272 = int_to_ptr.vmem [resolvable:$true] %s1271
          %1274 = dma.vmem_to_hbm [thread:$0]  %s1272, 128, %s1269, [#allocation30]
        $region112: #{tpu_custom_call.1} parent=55 // pred_fallthru
          _
        // Predicated region
        $region113: #{tpu_custom_call.1} parent=55 // pred_check
          %p1275 = pneg %p484
        $region114: #{tpu_custom_call.1} parent=55 // pred_check_branch
          %1277 = sbr.rel (%p1275) target = $region116
        $region115: #{tpu_custom_call.1} parent=55 // pred_region
          %s1279 = ssub.s32 128, 128
          %1280 = vsyncadd [#allocation30], %s1279
          %s1281 = smul.addr %s50, 128
          %s1282 = scalar_lea.hbm %s17, %s1281
          %s1284 = sshll.u32 [#allocation31], 4
          %s1285 = int_to_ptr.vmem [resolvable:$true] %s1284
          %1287 = dma.vmem_to_hbm [thread:$0]  %s1285, 128, %s1282, [#allocation30]
        $region116: #{tpu_custom_call.1} parent=55 // pred_fallthru
          _
        // Predicated region
        $region117: #{tpu_custom_call.1} parent=55 // pred_check
          %p1288 = pneg %p510
        $region118: #{tpu_custom_call.1} parent=55 // pred_check_branch
          %1290 = sbr.rel (%p1288) target = $region120
        $region119: #{tpu_custom_call.1} parent=55 // pred_region
          %s1292 = ssub.s32 128, 128
          %1293 = vsyncadd [#allocation33], %s1292
          %s1294 = smul.addr %s50, 128
          %s1295 = scalar_lea.hbm %s18, %s1294
          %s1297 = sshll.u32 [#allocation32], 4
          %s1298 = int_to_ptr.vmem [resolvable:$true] %s1297
          %1300 = dma.vmem_to_hbm [thread:$0]  %s1298, 128, %s1295, [#allocation33]
        $region120: #{tpu_custom_call.1} parent=55 // pred_fallthru
          _
        // Predicated region
        $region121: #{tpu_custom_call.1} parent=55 // pred_check
          %p1301 = pneg %p536
        $region122: #{tpu_custom_call.1} parent=55 // pred_check_branch
          %1303 = sbr.rel (%p1301) target = $region124
        $region123: #{tpu_custom_call.1} parent=55 // pred_region
          %s1305 = ssub.s32 128, 128
          %1306 = vsyncadd [#allocation33], %s1305
          %s1307 = smul.addr %s50, 128
          %s1308 = scalar_lea.hbm %s19, %s1307
          %s1310 = sshll.u32 [#allocation34], 4
          %s1311 = int_to_ptr.vmem [resolvable:$true] %s1310
          %1313 = dma.vmem_to_hbm [thread:$0]  %s1311, 128, %s1308, [#allocation33]
        $region124: #{tpu_custom_call.1} parent=55 // pred_fallthru
          _
        // Predicated region
        $region125: #{tpu_custom_call.1} parent=55 // pred_check
          %p1314 = pneg %p328
        $region126: #{tpu_custom_call.1} parent=55 // pred_check_branch
          %1316 = sbr.rel (%p1314) target = $region128
        $region127: #{tpu_custom_call.1} parent=55 // pred_region
          %1317 = dma.done [#allocation21], 128
        $region128: #{tpu_custom_call.1} parent=55 // pred_fallthru
          _
        // Predicated region
        $region129: #{tpu_custom_call.1} parent=55 // pred_check
          %p1318 = pneg %p354
        $region130: #{tpu_custom_call.1} parent=55 // pred_check_branch
          %1320 = sbr.rel (%p1318) target = $region132
        $region131: #{tpu_custom_call.1} parent=55 // pred_region
          %1321 = dma.done [#allocation24], 128
        $region132: #{tpu_custom_call.1} parent=55 // pred_fallthru
          _
        // Predicated region
        $region133: #{tpu_custom_call.1} parent=55 // pred_check
          %p1322 = pneg %p380
        $region134: #{tpu_custom_call.1} parent=55 // pred_check_branch
          %1324 = sbr.rel (%p1322) target = $region136
        $region135: #{tpu_custom_call.1} parent=55 // pred_region
          %1325 = dma.done [#allocation24], 128
        $region136: #{tpu_custom_call.1} parent=55 // pred_fallthru
          _
        // Predicated region
        $region137: #{tpu_custom_call.1} parent=55 // pred_check
          %p1326 = pneg %p406
        $region138: #{tpu_custom_call.1} parent=55 // pred_check_branch
          %1328 = sbr.rel (%p1326) target = $region140
        $region139: #{tpu_custom_call.1} parent=55 // pred_region
          %1329 = dma.done [#allocation27], 128
        $region140: #{tpu_custom_call.1} parent=55 // pred_fallthru
          _
        // Predicated region
        $region141: #{tpu_custom_call.1} parent=55 // pred_check
          %p1330 = pneg %p432
        $region142: #{tpu_custom_call.1} parent=55 // pred_check_branch
          %1332 = sbr.rel (%p1330) target = $region144
        $region143: #{tpu_custom_call.1} parent=55 // pred_region
          %1333 = dma.done [#allocation27], 128
        $region144: #{tpu_custom_call.1} parent=55 // pred_fallthru
          _
        // Predicated region
        $region145: #{tpu_custom_call.1} parent=55 // pred_check
          %p1334 = pneg %p458
        $region146: #{tpu_custom_call.1} parent=55 // pred_check_branch
          %1336 = sbr.rel (%p1334) target = $region148
        $region147: #{tpu_custom_call.1} parent=55 // pred_region
          %1337 = dma.done [#allocation30], 128
        $region148: #{tpu_custom_call.1} parent=55 // pred_fallthru
          _
        // Predicated region
        $region149: #{tpu_custom_call.1} parent=55 // pred_check
          %p1338 = pneg %p484
        $region150: #{tpu_custom_call.1} parent=55 // pred_check_branch
          %1340 = sbr.rel (%p1338) target = $region152
        $region151: #{tpu_custom_call.1} parent=55 // pred_region
          %1341 = dma.done [#allocation30], 128
        $region152: #{tpu_custom_call.1} parent=55 // pred_fallthru
          _
        // Predicated region
        $region153: #{tpu_custom_call.1} parent=55 // pred_check
          %p1342 = pneg %p510
        $region154: #{tpu_custom_call.1} parent=55 // pred_check_branch
          %1344 = sbr.rel (%p1342) target = $region156
        $region155: #{tpu_custom_call.1} parent=55 // pred_region
          %1345 = dma.done [#allocation33], 128
        $region156: #{tpu_custom_call.1} parent=55 // pred_fallthru
          _
        // Predicated region
        $region157: #{tpu_custom_call.1} parent=55 // pred_check
          %p1346 = pneg %p536
        $region158: #{tpu_custom_call.1} parent=55 // pred_check_branch
          %1348 = sbr.rel (%p1346) target = $region160
        $region159: #{tpu_custom_call.1} parent=55 // pred_region
          %1349 = dma.done [#allocation33], 128
        $region160: #{tpu_custom_call.1} parent=55 // pred_fallthru
          _
      $region56: #{tpu_custom_call.1} parent=5 // pred_fallthru
        _
      %p1350 = scmp.le.s32.totalorder 2, %s41
      // Predicated region
      $region161: #{tpu_custom_call.1} parent=5 // pred_check
        %p1351 = pneg %p1350
      $region162: #{tpu_custom_call.1} parent=5 // pred_check_branch
        %1353 = sbr.rel (%p1351) target = $region164
      $region163: #{tpu_custom_call.1} parent=5 // pred_region
        %s1354 = ssub.s32 %s41, 2
        // Predicated region
        $region165: #{tpu_custom_call.1} parent=163 // pred_check
          %p1355 = pneg %p280
        $region166: #{tpu_custom_call.1} parent=163 // pred_check_branch
          %1357 = sbr.rel (%p1355) target = $region168
        $region167: #{tpu_custom_call.1} parent=163 // pred_region
          %s1358 = sand.u32 %s265, 1
          %s1359 = scalar_lea.sflag [#allocation13], %s1358
          %s1360 = sand.u32 %s265, 1
          %s1361 = smul.addr %s1360, 8
          %s1362 = scalar_lea.vmem [#allocation19], %s1361
          %1363 = dma.done %s1359, 128
        $region168: #{tpu_custom_call.1} parent=163 // pred_fallthru
          _
        // Predicated region
        $region169: #{tpu_custom_call.1} parent=163 // pred_check
          %p1364 = pneg %p308
        $region170: #{tpu_custom_call.1} parent=163 // pred_check_branch
          %1366 = sbr.rel (%p1364) target = $region172
        $region171: #{tpu_custom_call.1} parent=163 // pred_region
          %s1367 = sand.u32 %s47, 1
          %s1368 = scalar_lea.sflag [#allocation21], %s1367
          %s1369 = sand.u32 %s293, 1
          %s1370 = smul.addr %s1369, 8
          %s1371 = scalar_lea.vmem [#allocation20], %s1370
          %1372 = dma.done %s1368, 128
        $region172: #{tpu_custom_call.1} parent=163 // pred_fallthru
          _
      $region164: #{tpu_custom_call.1} parent=5 // pred_fallthru
        _
    $region6: #{tpu_custom_call.1} parent=1 // loop_footer
      %s45 = sadd.s32 1, %s41
    $region7: #{tpu_custom_call.1} parent=1 // loop_footer_branch
      %40 = sbr.rel target = $region3
    $region8: #{tpu_custom_call.1} parent=1 // loop_exit
      _
    %1373 = vsyncpa [#allocation12], 1
    %s1374 = scalar_lea.sflag [#allocation12], 1
    %1375 = vsyncpa %s1374, 1
    %1376 = vsyncpa [#allocation15], 1
    %1377 = vsyncpa [#allocation18], 1
    %1378 = vsyncpa [#allocation13], 1
    %s1379 = scalar_lea.sflag [#allocation13], 1
    %1380 = vsyncpa %s1379, 1
    %1381 = vsyncpa [#allocation21], 1
    %s1382 = scalar_lea.sflag [#allocation21], 1
    %1383 = vsyncpa %s1382, 1
    %1384 = vsyncpa [#allocation24], 1
    %1385 = vsyncpa [#allocation27], 1
    %1386 = vsyncpa [#allocation30], 1
    %1387 = vsyncpa [#allocation33], 1

</llo_original>
